<compile_context>
chip_gen: v7x
topology: tpu7x:2x2x1
jax: 0.10.0
libtpu: 0.0.40
codegen_flags: <defaults>
</compile_context>

<pallas_src>
import functools
import math

import jax
import jax.numpy as jnp
from jax import lax
from jax.experimental import pallas as pl
from jax.experimental.pallas import tpu as pltpu


def _self_attention_kernel(x_ref, wqkv_ref, bqkv_ref, wo_ref, bo_ref,
                           gamma_ref, beta_ref, out_ref,
                           *, n_head, eps, compute_dtype):
    tb, n_img, input_dim = x_ref.shape
    d_model = wqkv_ref.shape[1] // 3
    head_dim = d_model // n_head
    rows = tb * n_img

    x = x_ref[...]                                           # (TB, n_img, D_in)
    x2d_f32 = x.reshape(rows, input_dim).astype(jnp.float32)
    x2d_mxu = x2d_f32.astype(compute_dtype)

    # --- fused Q/K/V projection: one wide MXU pass, f32 accumulate ----------
    qkv = jnp.dot(x2d_mxu, wqkv_ref[...].astype(compute_dtype),
                  preferred_element_type=jnp.float32) + bqkv_ref[...]
    # (rows, 3*d_model) f32

    scale = 1.0 / math.sqrt(head_dim)
    q = qkv[:, :d_model] * scale                             # scale folded into Q
    k = qkv[:, d_model:2 * d_model]
    v = qkv[:, 2 * d_model:]

    def to_heads(t):   # (rows, d_model) -> (TB*n_head, n_img, head_dim)
        return (t.reshape(tb, n_img, n_head, head_dim)
                 .transpose(0, 2, 1, 3)
                 .reshape(tb * n_head, n_img, head_dim))

    qh = to_heads(q).astype(compute_dtype)
    kh = to_heads(k).astype(compute_dtype)
    vh = to_heads(v).astype(compute_dtype)

    # --- batched scaled-dot-product attention (heads+batch on batch axis) ---
    # No explicit K transpose: contraction on the last dim of both operands.
    s = jnp.einsum('bqd,bkd->bqk', qh, kh,
                   preferred_element_type=jnp.float32)       # (TB*H, n, n) f32
    s_max = jnp.max(s, axis=-1, keepdims=True)
    p = jnp.exp(s - s_max)
    denom = jnp.sum(p, axis=-1, keepdims=True)
    p = p * pl.reciprocal(denom, approx=True)                # EUP reciprocal

    o = jnp.einsum('bqk,bkd->bqd', p.astype(compute_dtype), vh,
                   preferred_element_type=jnp.float32)       # (TB*H, n, hd)
    o = (o.reshape(tb, n_head, n_img, head_dim)
          .transpose(0, 2, 1, 3)
          .reshape(rows, d_model))                           # concat heads

    # --- output projection ---------------------------------------------------
    attn_out = jnp.dot(o.astype(compute_dtype), wo_ref[...].astype(compute_dtype),
                       preferred_element_type=jnp.float32) + bo_ref[...]

    # (dropout == identity in eval mode)

    # --- residual + LayerNorm (f32 vector math) ------------------------------
    y = attn_out + x2d_f32
    mean = jnp.mean(y, axis=-1, keepdims=True)
    var = jnp.mean(jnp.square(y - mean), axis=-1, keepdims=True)
    normed = (y - mean) * lax.rsqrt(var + eps)               # EUP rsqrt
    out2d = normed * gamma_ref[...] + beta_ref[...]

    out_ref[...] = out2d.reshape(tb, n_img, input_dim).astype(out_ref.dtype)


def self_attention_layer(x, params, *, n_head, eps=1e-12, block_bs=None,
                         compute_dtype=jnp.float32):
    """x: (bs, n_img, input_dim) -> (bs, n_img, input_dim)."""
    bs, n_img, input_dim = x.shape
    d_model = params["wq"].shape[1]

    if block_bs is None:
        block_bs = bs
    assert bs % block_bs == 0, "block_bs must divide bs"

    # Fuse QKV weights/biases once, outside the kernel.
    wqkv = jnp.concatenate([params["wq"], params["wk"], params["wv"]], axis=1)
    bqkv = jnp.concatenate([params["bq"], params["bk"], params["bv"]], axis=1)
    wo, bo = params["wo"], params["bo"]
    gamma, beta = params["gamma"], params["beta"]

    if jnp.dtype(compute_dtype) != jnp.dtype(jnp.float32):
        # Cast the big matmul weights only; biases/LN params stay f32.
        wqkv = wqkv.astype(compute_dtype)
        wo = wo.astype(compute_dtype)

    kernel = functools.partial(_self_attention_kernel, n_head=n_head, eps=eps,
                               compute_dtype=compute_dtype)

    full = lambda shape: pl.BlockSpec(shape, lambda b: (0, 0))

    return pl.pallas_call(
        kernel,
        out_shape=jax.ShapeDtypeStruct((bs, n_img, input_dim), x.dtype),
        grid_spec=pltpu.PrefetchScalarGridSpec(
            num_scalar_prefetch=0,
            grid=(bs // block_bs,),
            in_specs=[
                pl.BlockSpec((block_bs, n_img, input_dim), lambda b: (b, 0, 0)),  # x
                full((input_dim, 3 * d_model)),                                   # Wqkv
                full((1, 3 * d_model)),                                           # bqkv
                full((d_model, input_dim)),                                       # Wo
                full((1, input_dim)),                                             # bo
                full((1, input_dim)),                                             # gamma
                full((1, input_dim)),                                             # beta
            ],
            out_specs=pl.BlockSpec((block_bs, n_img, input_dim),
                                   lambda b: (b, 0, 0)),
        ),
        compiler_params=pltpu.CompilerParams(
            dimension_semantics=("parallel",)),
    )(x, wqkv, bqkv, wo, bo, gamma, beta)


def _reference(x, params, *, n_head, eps=1e-12):
    """Plain-JAX reference mirroring the PyTorch forward (eval mode)."""
    q = x @ params["wq"] + params["bq"]
    k = x @ params["wk"] + params["bk"]
    v = x @ params["wv"] + params["bv"]
    bs, n, d_model = q.shape
    hd = d_model // n_head

    def split(t):  # (bs, n, d_model) -> (bs, n_head, n, hd)
        return t.reshape(bs, n, n_head, hd).transpose(0, 2, 1, 3)

    qh, kh, vh = split(q), split(k), split(v)
    s = jnp.einsum("bhqd,bhkd->bhqk", qh, kh) / math.sqrt(hd)
    p = jax.nn.softmax(s, axis=-1)
    o = jnp.einsum("bhqk,bhkd->bhqd", p, vh)
    o = o.transpose(0, 2, 1, 3).reshape(bs, n, d_model)
    attn_out = o @ params["wo"] + params["bo"]
    y = attn_out + x
    mean = jnp.mean(y, axis=-1, keepdims=True)
    var = jnp.mean(jnp.square(y - mean), axis=-1, keepdims=True)
    return (y - mean) / jnp.sqrt(var + eps) * params["gamma"] + params["beta"]


def make_params(key, input_dim, d_model):
    ks = jax.random.split(key, 8)
    s = 0.05
    return {
        "wq": jax.random.normal(ks[0], (input_dim, d_model), jnp.float32) * s,
        "bq": jax.random.normal(ks[1], (1, d_model), jnp.float32) * s,
        "wk": jax.random.normal(ks[2], (input_dim, d_model), jnp.float32) * s,
        "bk": jax.random.normal(ks[3], (1, d_model), jnp.float32) * s,
        "wv": jax.random.normal(ks[4], (input_dim, d_model), jnp.float32) * s,
        "bv": jax.random.normal(ks[5], (1, d_model), jnp.float32) * s,
        "wo": jax.random.normal(ks[6], (d_model, input_dim), jnp.float32) * s,
        "bo": jax.random.normal(ks[7], (1, input_dim), jnp.float32) * s,
        "gamma": jnp.ones((1, input_dim), jnp.float32),
        "beta": jnp.zeros((1, input_dim), jnp.float32),
    }


if __name__ == "__main__":
    bs, n_img, input_dim = 2, 8, 32
    d_model, n_head = 32, 4

    key = jax.random.PRNGKey(0)
    kx, kp = jax.random.split(key)
    x = jax.random.normal(kx, (bs, n_img, input_dim), jnp.float32)
    params = make_params(kp, input_dim, d_model)

    ref = _reference(x, params, n_head=n_head)

    # f32 MXU operands (default path). Tolerance covers the EUP approximate
    # reciprocal / rsqrt used for softmax and LayerNorm.
    out_f32 = jax.block_until_ready(
        self_attention_layer(x, params, n_head=n_head))
    assert out_f32.shape == (bs, n_img, input_dim)
    assert jnp.allclose(out_f32, ref, atol=2e-3, rtol=2e-3), "f32 mismatch vs reference"

    # bf16 MXU operands (v6e/v7x fast path); softmax/residual/LayerNorm stay f32.
    out_bf16 = jax.block_until_ready(
        self_attention_layer(x, params, n_head=n_head, compute_dtype=jnp.bfloat16))
    assert jnp.allclose(out_bf16, ref, atol=3e-2, rtol=3e-2), "bf16 mismatch vs reference"

    print("KERNEL_OK")
</pallas_src>

<mosaic_0001>
module attributes {stable_mosaic.version = 11 : i64} {
  func.func @_self_attention_kernel(%arg0: i32, %arg1: memref<2x8x32xf32, #tpu.memory_space<vmem>>, %arg2: memref<32x96xf32, #tpu.memory_space<vmem>>, %arg3: memref<1x96xf32, #tpu.memory_space<vmem>>, %arg4: memref<32x32xf32, #tpu.memory_space<vmem>>, %arg5: memref<1x32xf32, #tpu.memory_space<vmem>>, %arg6: memref<1x32xf32, #tpu.memory_space<vmem>>, %arg7: memref<1x32xf32, #tpu.memory_space<vmem>>, %arg8: memref<2x8x32xf32, #tpu.memory_space<vmem>>) attributes {dimension_semantics = [#tpu.dimension_semantics<parallel>], iteration_bounds = array<i64: 1>, scalar_prefetch = 0 : i64, scratch_operands = 0 : i64, tpu.core_type = #tpu.core_type<tc>, window_params = [{transform_indices = @transform_0, window_bounds = array<i64: 2, 8, 32>}, {pipeline_mode = #tpu.pipeline_mode<synchronous>, transform_indices = @transform_1, window_bounds = array<i64: 32, 96>}, {pipeline_mode = #tpu.pipeline_mode<synchronous>, transform_indices = @transform_2, window_bounds = array<i64: 1, 96>}, {pipeline_mode = #tpu.pipeline_mode<synchronous>, transform_indices = @transform_3, window_bounds = array<i64: 32, 32>}, {pipeline_mode = #tpu.pipeline_mode<synchronous>, transform_indices = @transform_4, window_bounds = array<i64: 1, 32>}, {pipeline_mode = #tpu.pipeline_mode<synchronous>, transform_indices = @transform_5, window_bounds = array<i64: 1, 32>}, {pipeline_mode = #tpu.pipeline_mode<synchronous>, transform_indices = @transform_6, window_bounds = array<i64: 1, 32>}, {transform_indices = @transform_7, window_bounds = array<i64: 2, 8, 32>}]} {
    %c0 = arith.constant 0 : index
    %c0_0 = arith.constant 0 : index
    %c0_1 = arith.constant 0 : index
    %0 = vector.load %arg1[%c0, %c0_0, %c0_1] : memref<2x8x32xf32, #tpu.memory_space<vmem>>, vector<2x8x32xf32>
    %1 = vector.shape_cast %0 : vector<2x8x32xf32> to vector<16x32xf32>
    %c0_2 = arith.constant 0 : index
    %c0_3 = arith.constant 0 : index
    %2 = vector.load %arg2[%c0_2, %c0_3] : memref<32x96xf32, #tpu.memory_space<vmem>>, vector<32x96xf32>
    %cst = arith.constant dense<0.000000e+00> : vector<16x96xf32>
    %3 = tpu.matmul %1, %2, %cst {dimension_numbers = #tpu.dot_dimension_numbers<[1], [0], [0], [1], [0, 0, 1, 1], [], []>} : vector<16x32xf32>, vector<32x96xf32>, vector<16x96xf32> -> vector<16x96xf32>
    %c0_4 = arith.constant 0 : index
    %c0_5 = arith.constant 0 : index
    %4 = vector.load %arg3[%c0_4, %c0_5] : memref<1x96xf32, #tpu.memory_space<vmem>>, vector<1x96xf32>
    %5 = vector.broadcast %4 : vector<1x96xf32> to vector<16x96xf32>
    %6 = arith.addf %3, %5 : vector<16x96xf32>
    %7 = vector.extract_strided_slice %6 {offsets = [0, 0], sizes = [16, 32], strides = [1, 1]} : vector<16x96xf32> to vector<16x32xf32>
    %cst_6 = arith.constant 0.353553385 : f32
    %8 = vector.broadcast %cst_6 : f32 to vector<16x32xf32>
    %9 = arith.mulf %7, %8 : vector<16x32xf32>
    %10 = vector.extract_strided_slice %6 {offsets = [0, 32], sizes = [16, 32], strides = [1, 1]} : vector<16x96xf32> to vector<16x32xf32>
    %11 = vector.extract_strided_slice %6 {offsets = [0, 64], sizes = [16, 32], strides = [1, 1]} : vector<16x96xf32> to vector<16x32xf32>
    %12 = vector.shape_cast %9 : vector<16x32xf32> to vector<2x8x4x8xf32>
    %13 = tpu.transpose %12, [0, 2, 1, 3] : vector<2x8x4x8xf32> -> vector<2x4x8x8xf32>
    %14 = vector.shape_cast %13 : vector<2x4x8x8xf32> to vector<8x8x8xf32>
    %15 = vector.shape_cast %10 : vector<16x32xf32> to vector<2x8x4x8xf32>
    %16 = tpu.transpose %15, [0, 2, 1, 3] : vector<2x8x4x8xf32> -> vector<2x4x8x8xf32>
    %17 = vector.shape_cast %16 : vector<2x4x8x8xf32> to vector<8x8x8xf32>
    %18 = vector.shape_cast %11 : vector<16x32xf32> to vector<2x8x4x8xf32>
    %19 = tpu.transpose %18, [0, 2, 1, 3] : vector<2x8x4x8xf32> -> vector<2x4x8x8xf32>
    %20 = vector.shape_cast %19 : vector<2x4x8x8xf32> to vector<8x8x8xf32>
    "tpu.trace_start"() <{level = 10 : i32, message = "bqd,bkd->bqk"}> : () -> ()
    %cst_7 = arith.constant dense<0.000000e+00> : vector<8x8x8xf32>
    %21 = tpu.matmul %14, %17, %cst_7 {dimension_numbers = #tpu.dot_dimension_numbers<[2], [2], [1], [1], [0, 0, 0, 1, 1, 1], [0], [0]>} : vector<8x8x8xf32>, vector<8x8x8xf32>, vector<8x8x8xf32> -> vector<8x8x8xf32>
    "tpu.trace_stop"() : () -> ()
    %cst_8 = arith.constant dense<0xFF800000> : vector<8x8xf32>
    %22 = vector.multi_reduction <maximumf>, %21, %cst_8 [2] : vector<8x8x8xf32> to vector<8x8xf32>
    %23 = vector.shape_cast %22 : vector<8x8xf32> to vector<8x8x1xf32>
    %24 = vector.broadcast %23 : vector<8x8x1xf32> to vector<8x8x8xf32>
    %25 = arith.subf %21, %24 : vector<8x8x8xf32>
    %26 = math.exp %25 : vector<8x8x8xf32>
    %cst_9 = arith.constant dense<0.000000e+00> : vector<8x8xf32>
    %27 = vector.multi_reduction <add>, %26, %cst_9 [2] : vector<8x8x8xf32> to vector<8x8xf32>
    %28 = vector.shape_cast %27 : vector<8x8xf32> to vector<8x8x1xf32>
    %29 = tpu.reciprocal %28 {approx = true} : vector<8x8x1xf32> -> vector<8x8x1xf32>
    %30 = vector.broadcast %29 : vector<8x8x1xf32> to vector<8x8x8xf32>
    %31 = arith.mulf %26, %30 : vector<8x8x8xf32>
    "tpu.trace_start"() <{level = 10 : i32, message = "bqk,bkd->bqd"}> : () -> ()
    %cst_10 = arith.constant dense<0.000000e+00> : vector<8x8x8xf32>
    %32 = tpu.matmul %31, %20, %cst_10 {dimension_numbers = #tpu.dot_dimension_numbers<[2], [1], [1], [2], [0, 0, 0, 1, 1, 2], [0], [0]>} : vector<8x8x8xf32>, vector<8x8x8xf32>, vector<8x8x8xf32> -> vector<8x8x8xf32>
    "tpu.trace_stop"() : () -> ()
    %33 = vector.shape_cast %32 : vector<8x8x8xf32> to vector<2x4x8x8xf32>
    %34 = tpu.transpose %33, [0, 2, 1, 3] : vector<2x4x8x8xf32> -> vector<2x8x4x8xf32>
    %35 = vector.shape_cast %34 : vector<2x8x4x8xf32> to vector<16x32xf32>
    %c0_11 = arith.constant 0 : index
    %c0_12 = arith.constant 0 : index
    %36 = vector.load %arg4[%c0_11, %c0_12] : memref<32x32xf32, #tpu.memory_space<vmem>>, vector<32x32xf32>
    %cst_13 = arith.constant dense<0.000000e+00> : vector<16x32xf32>
    %37 = tpu.matmul %35, %36, %cst_13 {dimension_numbers = #tpu.dot_dimension_numbers<[1], [0], [0], [1], [0, 0, 1, 1], [], []>} : vector<16x32xf32>, vector<32x32xf32>, vector<16x32xf32> -> vector<16x32xf32>
    %c0_14 = arith.constant 0 : index
    %c0_15 = arith.constant 0 : index
    %38 = vector.load %arg5[%c0_14, %c0_15] : memref<1x32xf32, #tpu.memory_space<vmem>>, vector<1x32xf32>
    %39 = vector.broadcast %38 : vector<1x32xf32> to vector<16x32xf32>
    %40 = arith.addf %37, %39 : vector<16x32xf32>
    %41 = arith.addf %40, %1 : vector<16x32xf32>
    %cst_16 = arith.constant dense<0.000000e+00> : vector<16xf32>
    %42 = vector.multi_reduction <add>, %41, %cst_16 [1] : vector<16x32xf32> to vector<16xf32>
    %43 = vector.shape_cast %42 : vector<16xf32> to vector<16x1xf32>
    %cst_17 = arith.constant 3.200000e+01 : f32
    %44 = vector.broadcast %cst_17 : f32 to vector<16x1xf32>
    %45 = arith.divf %43, %44 : vector<16x1xf32>
    %46 = vector.broadcast %45 : vector<16x1xf32> to vector<16x32xf32>
    %47 = arith.subf %41, %46 : vector<16x32xf32>
    %48 = arith.mulf %47, %47 : vector<16x32xf32>
    %cst_18 = arith.constant dense<0.000000e+00> : vector<16xf32>
    %49 = vector.multi_reduction <add>, %48, %cst_18 [1] : vector<16x32xf32> to vector<16xf32>
    %50 = vector.shape_cast %49 : vector<16xf32> to vector<16x1xf32>
    %cst_19 = arith.constant 3.200000e+01 : f32
    %51 = vector.broadcast %cst_19 : f32 to vector<16x1xf32>
    %52 = arith.divf %50, %51 : vector<16x1xf32>
    %53 = vector.broadcast %45 : vector<16x1xf32> to vector<16x32xf32>
    %54 = arith.subf %41, %53 : vector<16x32xf32>
    %cst_20 = arith.constant 9.99999996E-13 : f32
    %55 = vector.broadcast %cst_20 : f32 to vector<16x1xf32>
    %56 = arith.addf %52, %55 : vector<16x1xf32>
    %57 = math.rsqrt %56 : vector<16x1xf32>
    %58 = vector.broadcast %57 : vector<16x1xf32> to vector<16x32xf32>
    %59 = arith.mulf %54, %58 : vector<16x32xf32>
    %c0_21 = arith.constant 0 : index
    %c0_22 = arith.constant 0 : index
    %60 = vector.load %arg6[%c0_21, %c0_22] : memref<1x32xf32, #tpu.memory_space<vmem>>, vector<1x32xf32>
    %61 = vector.broadcast %60 : vector<1x32xf32> to vector<16x32xf32>
    %62 = arith.mulf %59, %61 : vector<16x32xf32>
    %c0_23 = arith.constant 0 : index
    %c0_24 = arith.constant 0 : index
    %63 = vector.load %arg7[%c0_23, %c0_24] : memref<1x32xf32, #tpu.memory_space<vmem>>, vector<1x32xf32>
    %64 = vector.broadcast %63 : vector<1x32xf32> to vector<16x32xf32>
    %65 = arith.addf %62, %64 : vector<16x32xf32>
    %66 = vector.shape_cast %65 : vector<16x32xf32> to vector<2x8x32xf32>
    %c0_25 = arith.constant 0 : index
    %c0_26 = arith.constant 0 : index
    %c0_27 = arith.constant 0 : index
    %67 = vector.load %arg8[%c0_25, %c0_26, %c0_27] : memref<2x8x32xf32, #tpu.memory_space<vmem>>, vector<2x8x32xf32>
    tpu.vector_store %arg8[%c0_25, %c0_26, %c0_27], %66 {strides = array<i32>} : memref<2x8x32xf32, #tpu.memory_space<vmem>>, vector<2x8x32xf32>,
    return
  }
  func.func @transform_0(%arg0: i32) -> (i32, i32, i32) {
    %c0_i32 = arith.constant 0 : i32
    %c0_i32_0 = arith.constant 0 : i32
    %c0_i32_1 = arith.constant 0 : i32
    return %arg0, %c0_i32, %c0_i32_0 : i32, i32, i32
  }
  func.func @transform_1(%arg0: i32) -> (i32, i32) {
    %c0_i32 = arith.constant 0 : i32
    %c0_i32_0 = arith.constant 0 : i32
    %c0_i32_1 = arith.constant 0 : i32
    return %c0_i32, %c0_i32_0 : i32, i32
  }
  func.func @transform_2(%arg0: i32) -> (i32, i32) {
    %c0_i32 = arith.constant 0 : i32
    %c0_i32_0 = arith.constant 0 : i32
    %c0_i32_1 = arith.constant 0 : i32
    return %c0_i32, %c0_i32_0 : i32, i32
  }
  func.func @transform_3(%arg0: i32) -> (i32, i32) {
    %c0_i32 = arith.constant 0 : i32
    %c0_i32_0 = arith.constant 0 : i32
    %c0_i32_1 = arith.constant 0 : i32
    return %c0_i32, %c0_i32_0 : i32, i32
  }
  func.func @transform_4(%arg0: i32) -> (i32, i32) {
    %c0_i32 = arith.constant 0 : i32
    %c0_i32_0 = arith.constant 0 : i32
    %c0_i32_1 = arith.constant 0 : i32
    return %c0_i32, %c0_i32_0 : i32, i32
  }
  func.func @transform_5(%arg0: i32) -> (i32, i32) {
    %c0_i32 = arith.constant 0 : i32
    %c0_i32_0 = arith.constant 0 : i32
    %c0_i32_1 = arith.constant 0 : i32
    return %c0_i32, %c0_i32_0 : i32, i32
  }
  func.func @transform_6(%arg0: i32) -> (i32, i32) {
    %c0_i32 = arith.constant 0 : i32
    %c0_i32_0 = arith.constant 0 : i32
    %c0_i32_1 = arith.constant 0 : i32
    return %c0_i32, %c0_i32_0 : i32, i32
  }
  func.func @transform_7(%arg0: i32) -> (i32, i32, i32) {
    %c0_i32 = arith.constant 0 : i32
    %c0_i32_0 = arith.constant 0 : i32
    %c0_i32_1 = arith.constant 0 : i32
    return %arg0, %c0_i32, %c0_i32_0 : i32, i32, i32
  }
}

</mosaic_0001>

<llo_original>
// kernel: tpu_custom_call.1
$region0: #{tpu_custom_call.1}
  #allocation0 [shape = 'u32[]', space=smem, size = 0x4, offset = 0x4, fixed_abs, tag = 'smem constant byte address 0x4 - core index']
  #allocation1 [shape = 'u32[144,128]{1,0:T(1,128)}', space=vmem, size = 0x12000, scoped, tag = 'internal scratch']
  %s0 = inlined_call_operand.hbm [shape: f32[2,8,32], index: 0, kind: input, shape index: {}]
  %s1 = inlined_call_operand.hbm [shape: f32[32,96], index: 1, kind: input, shape index: {}]
  %s2 = inlined_call_operand.vmem [shape: f32[1,96], index: 2, kind: input, shape index: {}]
  %s3 = inlined_call_operand.hbm [shape: f32[32,32], index: 3, kind: input, shape index: {}]
  %s4 = inlined_call_operand.vmem [shape: f32[1,32], index: 4, kind: input, shape index: {}]
  %s5 = inlined_call_operand.vmem [shape: f32[1,32], index: 5, kind: input, shape index: {}]
  %s6 = inlined_call_operand.vmem [shape: f32[1,32], index: 6, kind: input, shape index: {}]
  %s7 = inlined_call_operand.hbm [shape: f32[2,8,32], index: 7, kind: output, shape index: {}]
  %s8 = sld [smem:[#allocation0]]
  $region50: #{tpu_custom_call.1} parent=0
    _
  %s10 = ssub.s32 1, %s8
  %s11 = scalar_select 0, %s10, %s8
  $region1: #{tpu_custom_call.1} parent=0
    #allocation2 [shape = 'u8[8192]{0}', space=vmem, size = 0x2000, scoped, tag = 'input window, operand 0, single buffered']
    #allocation3 [shape = 's32[1]{0}', space=sflag, size = 0x4, scoped, tag = 'scoped memory for tpu_custom_call.1']
    #allocation4 [shape = 's32[1]{0}', space=sflag, size = 0x4, scoped, tag = 'scoped memory for tpu_custom_call.1']
    #allocation5 [shape = 'u8[16384]{0}', space=vmem, size = 0x4000, scoped, tag = 'input window, operand 1, single buffered']
    #allocation6 [shape = 's32[1]{0}', space=sflag, size = 0x4, scoped, tag = 'scoped memory for tpu_custom_call.1']
    #allocation7 [shape = 'u8[16384]{0}', space=vmem, size = 0x4000, scoped, tag = 'input window, operand 3, single buffered']
    #allocation8 [shape = 'u8[8192]{0}', space=vmem, size = 0x2000, scoped, tag = 'output window, operand 0, single buffered']
    %12 = vsyncpa [#allocation3], 0
    %13 = vsyncpa [#allocation6], 0
    %14 = vsyncpa [#allocation4], 0
    // Predicated region
    $region2: #{tpu_custom_call.1} parent=1 // pred_check
      _
    $region3: #{tpu_custom_call.1} parent=1 // pred_check_branch
      %16 = sbr.rel (0) target = $region5
    $region4: #{tpu_custom_call.1} parent=1 // pred_region
      %s18 = ssub.s32 256, 256
      %19 = vsyncadd [#allocation3], %s18
      %s20 = sshll.u32 [#allocation2], 4
      %s21 = int_to_ptr.vmem [resolvable:$true] %s20
      %26 = dma.hbm_to_vmem [thread:$0]  %s0, 256, %s21, [#allocation3], 128, 128, 8
    $region5: #{tpu_custom_call.1} parent=1 // pred_fallthru
      _
    // Predicated region
    $region6: #{tpu_custom_call.1} parent=1 // pred_check
      _
    $region7: #{tpu_custom_call.1} parent=1 // pred_check_branch
      %28 = sbr.rel (0) target = $region9
    $region8: #{tpu_custom_call.1} parent=1 // pred_region
      %s30 = ssub.s32 512, 512
      %31 = vsyncadd [#allocation6], %s30
      %s32 = sshll.u32 [#allocation5], 4
      %s33 = int_to_ptr.vmem [resolvable:$true] %s32
      %38 = dma.hbm_to_vmem [thread:$0]  %s1, 512, %s33, [#allocation6], 128, 128, 8
    $region9: #{tpu_custom_call.1} parent=1 // pred_fallthru
      _
    // Predicated region
    $region10: #{tpu_custom_call.1} parent=1 // pred_check
      _
    $region11: #{tpu_custom_call.1} parent=1 // pred_check_branch
      %40 = sbr.rel (0) target = $region13
    $region12: #{tpu_custom_call.1} parent=1 // pred_region
      _
    $region13: #{tpu_custom_call.1} parent=1 // pred_fallthru
      _
    // Predicated region
    $region14: #{tpu_custom_call.1} parent=1 // pred_check
      _
    $region15: #{tpu_custom_call.1} parent=1 // pred_check_branch
      %42 = sbr.rel (0) target = $region17
    $region16: #{tpu_custom_call.1} parent=1 // pred_region
      %s44 = ssub.s32 512, 512
      %45 = vsyncadd [#allocation6], %s44
      %s46 = sshll.u32 [#allocation7], 4
      %s47 = int_to_ptr.vmem [resolvable:$true] %s46
      %52 = dma.hbm_to_vmem [thread:$0]  %s3, 512, %s47, [#allocation6], 128, 128, 8
    $region17: #{tpu_custom_call.1} parent=1 // pred_fallthru
      _
    // Predicated region
    $region18: #{tpu_custom_call.1} parent=1 // pred_check
      _
    $region19: #{tpu_custom_call.1} parent=1 // pred_check_branch
      %54 = sbr.rel (0) target = $region21
    $region20: #{tpu_custom_call.1} parent=1 // pred_region
      _
    $region21: #{tpu_custom_call.1} parent=1 // pred_fallthru
      _
    // Predicated region
    $region22: #{tpu_custom_call.1} parent=1 // pred_check
      _
    $region23: #{tpu_custom_call.1} parent=1 // pred_check_branch
      %56 = sbr.rel (0) target = $region25
    $region24: #{tpu_custom_call.1} parent=1 // pred_region
      _
    $region25: #{tpu_custom_call.1} parent=1 // pred_fallthru
      _
    // Predicated region
    $region26: #{tpu_custom_call.1} parent=1 // pred_check
      _
    $region27: #{tpu_custom_call.1} parent=1 // pred_check_branch
      %58 = sbr.rel (0) target = $region29
    $region28: #{tpu_custom_call.1} parent=1 // pred_region
      _
    $region29: #{tpu_custom_call.1} parent=1 // pred_fallthru
      _
    // Predicated region
    $region30: #{tpu_custom_call.1} parent=1 // pred_check
      _
    $region31: #{tpu_custom_call.1} parent=1 // pred_check_branch
      %60 = sbr.rel (0) target = $region33
    $region32: #{tpu_custom_call.1} parent=1 // pred_region
      %61 = dma.done [#allocation3], 256
    $region33: #{tpu_custom_call.1} parent=1 // pred_fallthru
      _
    // Predicated region
    $region34: #{tpu_custom_call.1} parent=1 // pred_check
      _
    $region35: #{tpu_custom_call.1} parent=1 // pred_check_branch
      %63 = sbr.rel (0) target = $region37
    $region36: #{tpu_custom_call.1} parent=1 // pred_region
      %64 = dma.done [#allocation6], 512
    $region37: #{tpu_custom_call.1} parent=1 // pred_fallthru
      _
    // Predicated region
    $region38: #{tpu_custom_call.1} parent=1 // pred_check
      _
    $region39: #{tpu_custom_call.1} parent=1 // pred_check_branch
      %66 = sbr.rel (0) target = $region41
    $region40: #{tpu_custom_call.1} parent=1 // pred_region
      %67 = dma.done [#allocation6], 512
    $region41: #{tpu_custom_call.1} parent=1 // pred_fallthru
      _
    %v68 = vld [vmem:[#allocation2] sm:$0xff]
    %v69 = vld [vmem:[#allocation2 + $0x8] sm:$0xff]
    %v70 = vld [vmem:[#allocation5] sm:$0xff]
    %v71 = vld [vmem:[#allocation5 + $0x8] sm:$0xff]
    %v72 = vld [vmem:[#allocation5 + $0x10] sm:$0xff]
    %v73 = vld [vmem:[#allocation5 + $0x18] sm:$0xff]
    %v74 = vld [vmem:[%s2] sm:$0x1]
    %v76 = vlaneseq
    %v77 = vshrl.u32 %v76, 7
    %v78 = vsub.s32 0, %v77
    %v79 = vrot.slane %v74, %v78
    %vm81 = vcmask 261120
    %v83 = vsel %vm81, %v68, 0
    %v86 = vsel %vm81, %v69, 0
    %88 = vmatprep.subr.mxu0 0.0
    %89 = vmatpush1.msra.mxu0 %v70
    %90 = vmatprep.subr.mxu0 0.0
    %91 = vmatpush1.msra.mxu0 %v71
    %92 = vmatprep.subr.mxu0 0.0
    %93 = vmatpush1.msra.mxu0 %v72
    %94 = vmatprep.subr.mxu0 0.0
    %95 = vmatpush1.msra.mxu0 %v73
    %96 = vmatprep.subr.mxu0 0.0
    %97 = vmatpush1.msra.mxu0 0.0
    %98 = vmatprep.subr.mxu0 0.0
    %99 = vmatpush1.msra.mxu0 0.0
    %100 = vmatprep.subr.mxu0 0.0
    %101 = vmatpush1.msra.mxu0 0.0
    %102 = vmatprep.subr.mxu0 0.0
    %103 = vmatpush1.msra.mxu0 0.0
    %104 = vmatprep.subr.mxu0 0.0
    %105 = vmatpush1.msra.mxu0 0.0
    %106 = vmatprep.subr.mxu0 0.0
    %107 = vmatpush1.msra.mxu0 0.0
    %108 = vmatprep.subr.mxu0 0.0
    %109 = vmatpush1.msra.mxu0 0.0
    %110 = vmatprep.subr.mxu0 0.0
    %111 = vmatpush1.msra.mxu0 0.0
    %112 = vmatprep.subr.mxu0 0.0
    %113 = vmatpush1.msra.mxu0 0.0
    %114 = vmatprep.subr.mxu0 0.0
    %115 = vmatpush1.msra.mxu0 0.0
    %116 = vmatprep.subr.mxu0 0.0
    %117 = vmatpush1.msra.mxu0 0.0
    %118 = vmatprep.subr.mxu0 0.0
    %119 = vmatpush1.msra.mxu0 0.0
    %120 = vmatprep.subr.mxu0 0.0
    %121 = vmatpush1.msra.mxu0 0.0
    %122 = vmatprep.subr.mxu0 0.0
    %123 = vmatpush1.msra.mxu0 0.0
    %124 = vmatprep.subr.mxu0 0.0
    %125 = vmatpush1.msra.mxu0 0.0
    %126 = vmatprep.subr.mxu0 0.0
    %127 = vmatpush1.msra.mxu0 0.0
    %128 = vmatprep.subr.mxu0 0.0
    %129 = vmatpush1.msra.mxu0 0.0
    %130 = vmatprep.subr.mxu0 0.0
    %131 = vmatpush1.msra.mxu0 0.0
    %132 = vmatprep.subr.mxu0 0.0
    %133 = vmatpush1.msra.mxu0 0.0
    %134 = vmatprep.subr.mxu0 0.0
    %135 = vmatpush1.msra.mxu0 0.0
    %136 = vmatprep.subr.mxu0 0.0
    %137 = vmatpush1.msra.mxu0 0.0
    %138 = vmatprep.subr.mxu0 0.0
    %139 = vmatpush1.msra.mxu0 0.0
    %140 = vmatprep.subr.mxu0 0.0
    %141 = vmatpush1.msra.mxu0 0.0
    %142 = vmatprep.subr.mxu0 0.0
    %143 = vmatpush1.msra.mxu0 0.0
    %144 = vmatprep.subr.mxu0 0.0
    %145 = vmatpush1.msra.mxu0 0.0
    %146 = vmatprep.subr.mxu0 0.0
    %147 = vmatpush1.msra.mxu0 0.0
    %148 = vmatprep.subr.mxu0 0.0
    %149 = vmatpush1.msra.mxu0 0.0
    %150 = vmatprep.subr.mxu0 0.0
    %151 = vmatpush1.msra.mxu0 0.0
    %152 = vmatprep.mubr.f32.mxu0 0.0
    %153 = vmatmul.mubr.f32.gmra.mrb[0].mxu0 %v83
    %v154 = vpop.f32.mrb[0].mxu0
    %v155 = vadd.f32 %v79, %v154
    %v156 = vpop.f32.mrb[0].mxu0
    %157 = vmatprep.mubr.f32.mxu0 0.0
    %158 = vmatmul.mubr.f32.gmra.mrb[0].mxu0 %v86
    %v159 = vpop.f32.mrb[0].mxu0
    %v160 = vadd.f32 %v79, %v159
    %v161 = vpop.f32.mrb[0].mxu0
    %162 = vdwg.mxu0
    %v163 = vmul.f32 %v155, 0.35355338
    %v164 = vmul.f32 %v160, 0.35355338
    %167 = vrot.lane.b32.xlu0 %v163, 120
    %v168 = vpop.permute.xlu0 %167
    %169 = vrot.lane.b32.xlu0 %v164, 120
    %v170 = vpop.permute.xlu0 %169
    %173 = vrot.lane.b32.xlu0 %v163, 112
    %v174 = vpop.permute.xlu0 %173
    %175 = vrot.lane.b32.xlu0 %v164, 112
    %v176 = vpop.permute.xlu0 %175
    %179 = vrot.lane.b32.xlu0 %v163, 104
    %v180 = vpop.permute.xlu0 %179
    %181 = vrot.lane.b32.xlu0 %v164, 104
    %v182 = vpop.permute.xlu0 %181
    %v185 = vcombine.low %v163, %v174
    %v186 = vcombine.high %v163, %v174
    %v188 = vunpack.c.l.s4 1983009808
    %v189 = vunpack.c.0.s8 %v188
    %v190 = vlaneseq
    %v191 = vshrl.u32 %v190, 7
    %v192 = vsub.s32 %v189, %v191
    %v193 = vrot.slane %v185, %v192
    %v195 = vunpack.c.l.s4 1983009808
    %v196 = vunpack.c.0.s8 %v195
    %v197 = vlaneseq
    %v198 = vshrl.u32 %v197, 7
    %v199 = vsub.s32 %v196, %v198
    %v200 = vrot.slane %v186, %v199
    %v201 = vcombine.low %v168, %v180
    %v202 = vcombine.high %v168, %v180
    %v204 = vunpack.c.l.s4 1983009808
    %v205 = vunpack.c.0.s8 %v204
    %v206 = vlaneseq
    %v207 = vshrl.u32 %v206, 7
    %v208 = vsub.s32 %v205, %v207
    %v209 = vrot.slane %v201, %v208
    %v211 = vunpack.c.l.s4 1983009808
    %v212 = vunpack.c.0.s8 %v211
    %v213 = vlaneseq
    %v214 = vshrl.u32 %v213, 7
    %v215 = vsub.s32 %v212, %v214
    %v216 = vrot.slane %v202, %v215
    %v217 = vcombine.low %v193, %v209
    %v218 = vcombine.high %v193, %v209
    %v220 = vunpack.c.l.s4 1934713408
    %v221 = vunpack.c.0.s8 %v220
    %v222 = vlaneseq
    %v223 = vshrl.u32 %v222, 7
    %v224 = vsub.s32 %v221, %v223
    %v225 = vrot.slane %v217, %v224
    %v227 = vunpack.c.l.s4 1934713408
    %v228 = vunpack.c.0.s8 %v227
    %v229 = vlaneseq
    %v230 = vshrl.u32 %v229, 7
    %v231 = vsub.s32 %v228, %v230
    %v232 = vrot.slane %v218, %v231
    %v233 = vcombine.low %v200, %v216
    %v234 = vcombine.high %v200, %v216
    %v236 = vunpack.c.l.s4 1934713408
    %v237 = vunpack.c.0.s8 %v236
    %v238 = vlaneseq
    %v239 = vshrl.u32 %v238, 7
    %v240 = vsub.s32 %v237, %v239
    %v241 = vrot.slane %v233, %v240
    %v243 = vunpack.c.l.s4 1934713408
    %v244 = vunpack.c.0.s8 %v243
    %v245 = vlaneseq
    %v246 = vshrl.u32 %v245, 7
    %v247 = vsub.s32 %v244, %v246
    %v248 = vrot.slane %v234, %v247
    %v249 = vcombine.high %v225, 0.0
    %v250 = vcombine.high %v232, 0.0
    %v251 = vcombine.high %v241, 0.0
    %v252 = vcombine.high %v248, 0.0
    %v253 = vcombine.low %v164, %v176
    %v254 = vcombine.high %v164, %v176
    %v256 = vunpack.c.l.s4 1983009808
    %v257 = vunpack.c.0.s8 %v256
    %v258 = vlaneseq
    %v259 = vshrl.u32 %v258, 7
    %v260 = vsub.s32 %v257, %v259
    %v261 = vrot.slane %v253, %v260
    %v263 = vunpack.c.l.s4 1983009808
    %v264 = vunpack.c.0.s8 %v263
    %v265 = vlaneseq
    %v266 = vshrl.u32 %v265, 7
    %v267 = vsub.s32 %v264, %v266
    %v268 = vrot.slane %v254, %v267
    %v269 = vcombine.low %v170, %v182
    %v270 = vcombine.high %v170, %v182
    %v272 = vunpack.c.l.s4 1983009808
    %v273 = vunpack.c.0.s8 %v272
    %v274 = vlaneseq
    %v275 = vshrl.u32 %v274, 7
    %v276 = vsub.s32 %v273, %v275
    %v277 = vrot.slane %v269, %v276
    %v279 = vunpack.c.l.s4 1983009808
    %v280 = vunpack.c.0.s8 %v279
    %v281 = vlaneseq
    %v282 = vshrl.u32 %v281, 7
    %v283 = vsub.s32 %v280, %v282
    %v284 = vrot.slane %v270, %v283
    %v285 = vcombine.low %v261, %v277
    %v286 = vcombine.high %v261, %v277
    %v288 = vunpack.c.l.s4 1934713408
    %v289 = vunpack.c.0.s8 %v288
    %v290 = vlaneseq
    %v291 = vshrl.u32 %v290, 7
    %v292 = vsub.s32 %v289, %v291
    %v293 = vrot.slane %v285, %v292
    %v295 = vunpack.c.l.s4 1934713408
    %v296 = vunpack.c.0.s8 %v295
    %v297 = vlaneseq
    %v298 = vshrl.u32 %v297, 7
    %v299 = vsub.s32 %v296, %v298
    %v300 = vrot.slane %v286, %v299
    %v301 = vcombine.low %v268, %v284
    %v302 = vcombine.high %v268, %v284
    %v304 = vunpack.c.l.s4 1934713408
    %v305 = vunpack.c.0.s8 %v304
    %v306 = vlaneseq
    %v307 = vshrl.u32 %v306, 7
    %v308 = vsub.s32 %v305, %v307
    %v309 = vrot.slane %v301, %v308
    %v311 = vunpack.c.l.s4 1934713408
    %v312 = vunpack.c.0.s8 %v311
    %v313 = vlaneseq
    %v314 = vshrl.u32 %v313, 7
    %v315 = vsub.s32 %v312, %v314
    %v316 = vrot.slane %v302, %v315
    %v317 = vcombine.high %v293, 0.0
    %v318 = vcombine.high %v300, 0.0
    %v319 = vcombine.high %v309, 0.0
    %v320 = vcombine.high %v316, 0.0
    %v321 = vcombine.low %v225, %v232
    %v323 = vunpack.c.l.s4 1983009808
    %v324 = vunpack.c.0.s8 %v323
    %v325 = vlaneseq
    %v326 = vshrl.u32 %v325, 7
    %v327 = vsub.s32 %v324, %v326
    %v328 = vrot.slane %v321, %v327
    %v329 = vcombine.low %v249, %v250
    %v331 = vunpack.c.l.s4 1983009808
    %v332 = vunpack.c.0.s8 %v331
    %v333 = vlaneseq
    %v334 = vshrl.u32 %v333, 7
    %v335 = vsub.s32 %v332, %v334
    %v336 = vrot.slane %v329, %v335
    %v337 = vcombine.low %v241, %v248
    %v339 = vunpack.c.l.s4 1983009808
    %v340 = vunpack.c.0.s8 %v339
    %v341 = vlaneseq
    %v342 = vshrl.u32 %v341, 7
    %v343 = vsub.s32 %v340, %v342
    %v344 = vrot.slane %v337, %v343
    %v345 = vcombine.low %v251, %v252
    %v347 = vunpack.c.l.s4 1983009808
    %v348 = vunpack.c.0.s8 %v347
    %v349 = vlaneseq
    %v350 = vshrl.u32 %v349, 7
    %v351 = vsub.s32 %v348, %v350
    %v352 = vrot.slane %v345, %v351
    %v353 = vcombine.low %v328, %v336
    %v354 = vcombine.high %v328, %v336
    %v356 = vunpack.c.l.s4 1934713408
    %v357 = vunpack.c.0.s8 %v356
    %v358 = vlaneseq
    %v359 = vshrl.u32 %v358, 7
    %v360 = vsub.s32 %v357, %v359
    %v361 = vrot.slane %v353, %v360
    %v363 = vunpack.c.l.s4 1934713408
    %v364 = vunpack.c.0.s8 %v363
    %v365 = vlaneseq
    %v366 = vshrl.u32 %v365, 7
    %v367 = vsub.s32 %v364, %v366
    %v368 = vrot.slane %v354, %v367
    %v369 = vcombine.low %v344, %v352
    %v370 = vcombine.high %v344, %v352
    %v372 = vunpack.c.l.s4 1934713408
    %v373 = vunpack.c.0.s8 %v372
    %v374 = vlaneseq
    %v375 = vshrl.u32 %v374, 7
    %v376 = vsub.s32 %v373, %v375
    %v377 = vrot.slane %v369, %v376
    %v379 = vunpack.c.l.s4 1934713408
    %v380 = vunpack.c.0.s8 %v379
    %v381 = vlaneseq
    %v382 = vshrl.u32 %v381, 7
    %v383 = vsub.s32 %v380, %v382
    %v384 = vrot.slane %v370, %v383
    %v385 = vcombine.low %v361, %v377
    %v386 = vcombine.high %v361, %v377
    %v387 = vcombine.low %v368, %v384
    %v388 = vcombine.high %v368, %v384
    %v389 = vcombine.low %v293, %v300
    %v391 = vunpack.c.l.s4 1983009808
    %v392 = vunpack.c.0.s8 %v391
    %v393 = vlaneseq
    %v394 = vshrl.u32 %v393, 7
    %v395 = vsub.s32 %v392, %v394
    %v396 = vrot.slane %v389, %v395
    %v397 = vcombine.low %v317, %v318
    %v399 = vunpack.c.l.s4 1983009808
    %v400 = vunpack.c.0.s8 %v399
    %v401 = vlaneseq
    %v402 = vshrl.u32 %v401, 7
    %v403 = vsub.s32 %v400, %v402
    %v404 = vrot.slane %v397, %v403
    %v405 = vcombine.low %v309, %v316
    %v407 = vunpack.c.l.s4 1983009808
    %v408 = vunpack.c.0.s8 %v407
    %v409 = vlaneseq
    %v410 = vshrl.u32 %v409, 7
    %v411 = vsub.s32 %v408, %v410
    %v412 = vrot.slane %v405, %v411
    %v413 = vcombine.low %v319, %v320
    %v415 = vunpack.c.l.s4 1983009808
    %v416 = vunpack.c.0.s8 %v415
    %v417 = vlaneseq
    %v418 = vshrl.u32 %v417, 7
    %v419 = vsub.s32 %v416, %v418
    %v420 = vrot.slane %v413, %v419
    %v421 = vcombine.low %v396, %v404
    %v422 = vcombine.high %v396, %v404
    %v424 = vunpack.c.l.s4 1934713408
    %v425 = vunpack.c.0.s8 %v424
    %v426 = vlaneseq
    %v427 = vshrl.u32 %v426, 7
    %v428 = vsub.s32 %v425, %v427
    %v429 = vrot.slane %v421, %v428
    %v431 = vunpack.c.l.s4 1934713408
    %v432 = vunpack.c.0.s8 %v431
    %v433 = vlaneseq
    %v434 = vshrl.u32 %v433, 7
    %v435 = vsub.s32 %v432, %v434
    %v436 = vrot.slane %v422, %v435
    %v437 = vcombine.low %v412, %v420
    %v438 = vcombine.high %v412, %v420
    %v440 = vunpack.c.l.s4 1934713408
    %v441 = vunpack.c.0.s8 %v440
    %v442 = vlaneseq
    %v443 = vshrl.u32 %v442, 7
    %v444 = vsub.s32 %v441, %v443
    %v445 = vrot.slane %v437, %v444
    %v447 = vunpack.c.l.s4 1934713408
    %v448 = vunpack.c.0.s8 %v447
    %v449 = vlaneseq
    %v450 = vshrl.u32 %v449, 7
    %v451 = vsub.s32 %v448, %v450
    %v452 = vrot.slane %v438, %v451
    %v453 = vcombine.low %v429, %v445
    %v454 = vcombine.high %v429, %v445
    %v455 = vcombine.low %v436, %v452
    %v456 = vcombine.high %v436, %v452
    %459 = vrot.lane.b32.xlu0 %v155, 120
    %v460 = vpop.permute.xlu0 %459
    %461 = vrot.lane.b32.xlu0 %v160, 120
    %v462 = vpop.permute.xlu0 %461
    %463 = vrot.lane.b32.xlu0 %v155, 112
    %v464 = vpop.permute.xlu0 %463
    %465 = vrot.lane.b32.xlu0 %v160, 112
    %v466 = vpop.permute.xlu0 %465
    %467 = vrot.lane.b32.xlu0 %v155, 104
    %v468 = vpop.permute.xlu0 %467
    %469 = vrot.lane.b32.xlu0 %v160, 104
    %v470 = vpop.permute.xlu0 %469
    %471 = vrot.lane.b32.xlu0 %v155, 96
    %v472 = vpop.permute.xlu0 %471
    %473 = vrot.lane.b32.xlu0 %v160, 96
    %v474 = vpop.permute.xlu0 %473
    %475 = vrot.lane.b32.xlu0 %v460, 96
    %v476 = vpop.permute.xlu0 %475
    %477 = vrot.lane.b32.xlu0 %v462, 96
    %v478 = vpop.permute.xlu0 %477
    %479 = vrot.lane.b32.xlu0 %v464, 96
    %v480 = vpop.permute.xlu0 %479
    %481 = vrot.lane.b32.xlu0 %v466, 96
    %v482 = vpop.permute.xlu0 %481
    %483 = vrot.lane.b32.xlu0 %v468, 96
    %v484 = vpop.permute.xlu0 %483
    %485 = vrot.lane.b32.xlu0 %v470, 96
    %v486 = vpop.permute.xlu0 %485
    %v495 = vcombine.low %v472, %v480
    %v496 = vcombine.high %v472, %v480
    %v498 = vunpack.c.l.s4 1983009808
    %v499 = vunpack.c.0.s8 %v498
    %v500 = vlaneseq
    %v501 = vshrl.u32 %v500, 7
    %v502 = vsub.s32 %v499, %v501
    %v503 = vrot.slane %v495, %v502
    %v505 = vunpack.c.l.s4 1983009808
    %v506 = vunpack.c.0.s8 %v505
    %v507 = vlaneseq
    %v508 = vshrl.u32 %v507, 7
    %v509 = vsub.s32 %v506, %v508
    %v510 = vrot.slane %v496, %v509
    %v511 = vcombine.low %v476, %v484
    %v512 = vcombine.high %v476, %v484
    %v514 = vunpack.c.l.s4 1983009808
    %v515 = vunpack.c.0.s8 %v514
    %v516 = vlaneseq
    %v517 = vshrl.u32 %v516, 7
    %v518 = vsub.s32 %v515, %v517
    %v519 = vrot.slane %v511, %v518
    %v521 = vunpack.c.l.s4 1983009808
    %v522 = vunpack.c.0.s8 %v521
    %v523 = vlaneseq
    %v524 = vshrl.u32 %v523, 7
    %v525 = vsub.s32 %v522, %v524
    %v526 = vrot.slane %v512, %v525
    %v527 = vcombine.low %v503, %v519
    %v528 = vcombine.high %v503, %v519
    %v530 = vunpack.c.l.s4 1934713408
    %v531 = vunpack.c.0.s8 %v530
    %v532 = vlaneseq
    %v533 = vshrl.u32 %v532, 7
    %v534 = vsub.s32 %v531, %v533
    %v535 = vrot.slane %v527, %v534
    %v537 = vunpack.c.l.s4 1934713408
    %v538 = vunpack.c.0.s8 %v537
    %v539 = vlaneseq
    %v540 = vshrl.u32 %v539, 7
    %v541 = vsub.s32 %v538, %v540
    %v542 = vrot.slane %v528, %v541
    %v543 = vcombine.low %v510, %v526
    %v544 = vcombine.high %v510, %v526
    %v546 = vunpack.c.l.s4 1934713408
    %v547 = vunpack.c.0.s8 %v546
    %v548 = vlaneseq
    %v549 = vshrl.u32 %v548, 7
    %v550 = vsub.s32 %v547, %v549
    %v551 = vrot.slane %v543, %v550
    %v553 = vunpack.c.l.s4 1934713408
    %v554 = vunpack.c.0.s8 %v553
    %v555 = vlaneseq
    %v556 = vshrl.u32 %v555, 7
    %v557 = vsub.s32 %v554, %v556
    %v558 = vrot.slane %v544, %v557
    %v559 = vcombine.high %v535, 0.0
    %v560 = vcombine.high %v542, 0.0
    %v561 = vcombine.high %v551, 0.0
    %v562 = vcombine.high %v558, 0.0
    %v563 = vcombine.low %v474, %v482
    %v564 = vcombine.high %v474, %v482
    %v566 = vunpack.c.l.s4 1983009808
    %v567 = vunpack.c.0.s8 %v566
    %v568 = vlaneseq
    %v569 = vshrl.u32 %v568, 7
    %v570 = vsub.s32 %v567, %v569
    %v571 = vrot.slane %v563, %v570
    %v573 = vunpack.c.l.s4 1983009808
    %v574 = vunpack.c.0.s8 %v573
    %v575 = vlaneseq
    %v576 = vshrl.u32 %v575, 7
    %v577 = vsub.s32 %v574, %v576
    %v578 = vrot.slane %v564, %v577
    %v579 = vcombine.low %v478, %v486
    %v580 = vcombine.high %v478, %v486
    %v582 = vunpack.c.l.s4 1983009808
    %v583 = vunpack.c.0.s8 %v582
    %v584 = vlaneseq
    %v585 = vshrl.u32 %v584, 7
    %v586 = vsub.s32 %v583, %v585
    %v587 = vrot.slane %v579, %v586
    %v589 = vunpack.c.l.s4 1983009808
    %v590 = vunpack.c.0.s8 %v589
    %v591 = vlaneseq
    %v592 = vshrl.u32 %v591, 7
    %v593 = vsub.s32 %v590, %v592
    %v594 = vrot.slane %v580, %v593
    %v595 = vcombine.low %v571, %v587
    %v596 = vcombine.high %v571, %v587
    %v598 = vunpack.c.l.s4 1934713408
    %v599 = vunpack.c.0.s8 %v598
    %v600 = vlaneseq
    %v601 = vshrl.u32 %v600, 7
    %v602 = vsub.s32 %v599, %v601
    %v603 = vrot.slane %v595, %v602
    %v605 = vunpack.c.l.s4 1934713408
    %v606 = vunpack.c.0.s8 %v605
    %v607 = vlaneseq
    %v608 = vshrl.u32 %v607, 7
    %v609 = vsub.s32 %v606, %v608
    %v610 = vrot.slane %v596, %v609
    %v611 = vcombine.low %v578, %v594
    %v612 = vcombine.high %v578, %v594
    %v614 = vunpack.c.l.s4 1934713408
    %v615 = vunpack.c.0.s8 %v614
    %v616 = vlaneseq
    %v617 = vshrl.u32 %v616, 7
    %v618 = vsub.s32 %v615, %v617
    %v619 = vrot.slane %v611, %v618
    %v621 = vunpack.c.l.s4 1934713408
    %v622 = vunpack.c.0.s8 %v621
    %v623 = vlaneseq
    %v624 = vshrl.u32 %v623, 7
    %v625 = vsub.s32 %v622, %v624
    %v626 = vrot.slane %v612, %v625
    %v627 = vcombine.high %v603, 0.0
    %v628 = vcombine.high %v610, 0.0
    %v629 = vcombine.high %v619, 0.0
    %v630 = vcombine.high %v626, 0.0
    %v631 = vcombine.low %v535, %v542
    %v633 = vunpack.c.l.s4 1983009808
    %v634 = vunpack.c.0.s8 %v633
    %v635 = vlaneseq
    %v636 = vshrl.u32 %v635, 7
    %v637 = vsub.s32 %v634, %v636
    %v638 = vrot.slane %v631, %v637
    %v639 = vcombine.low %v559, %v560
    %v641 = vunpack.c.l.s4 1983009808
    %v642 = vunpack.c.0.s8 %v641
    %v643 = vlaneseq
    %v644 = vshrl.u32 %v643, 7
    %v645 = vsub.s32 %v642, %v644
    %v646 = vrot.slane %v639, %v645
    %v647 = vcombine.low %v551, %v558
    %v649 = vunpack.c.l.s4 1983009808
    %v650 = vunpack.c.0.s8 %v649
    %v651 = vlaneseq
    %v652 = vshrl.u32 %v651, 7
    %v653 = vsub.s32 %v650, %v652
    %v654 = vrot.slane %v647, %v653
    %v655 = vcombine.low %v561, %v562
    %v657 = vunpack.c.l.s4 1983009808
    %v658 = vunpack.c.0.s8 %v657
    %v659 = vlaneseq
    %v660 = vshrl.u32 %v659, 7
    %v661 = vsub.s32 %v658, %v660
    %v662 = vrot.slane %v655, %v661
    %v663 = vcombine.low %v638, %v646
    %v664 = vcombine.high %v638, %v646
    %v666 = vunpack.c.l.s4 1934713408
    %v667 = vunpack.c.0.s8 %v666
    %v668 = vlaneseq
    %v669 = vshrl.u32 %v668, 7
    %v670 = vsub.s32 %v667, %v669
    %v671 = vrot.slane %v663, %v670
    %v673 = vunpack.c.l.s4 1934713408
    %v674 = vunpack.c.0.s8 %v673
    %v675 = vlaneseq
    %v676 = vshrl.u32 %v675, 7
    %v677 = vsub.s32 %v674, %v676
    %v678 = vrot.slane %v664, %v677
    %v679 = vcombine.low %v654, %v662
    %v680 = vcombine.high %v654, %v662
    %v682 = vunpack.c.l.s4 1934713408
    %v683 = vunpack.c.0.s8 %v682
    %v684 = vlaneseq
    %v685 = vshrl.u32 %v684, 7
    %v686 = vsub.s32 %v683, %v685
    %v687 = vrot.slane %v679, %v686
    %v689 = vunpack.c.l.s4 1934713408
    %v690 = vunpack.c.0.s8 %v689
    %v691 = vlaneseq
    %v692 = vshrl.u32 %v691, 7
    %v693 = vsub.s32 %v690, %v692
    %v694 = vrot.slane %v680, %v693
    %v695 = vcombine.low %v671, %v687
    %v696 = vcombine.high %v671, %v687
    %v697 = vcombine.low %v678, %v694
    %v698 = vcombine.high %v678, %v694
    %v699 = vcombine.low %v603, %v610
    %v701 = vunpack.c.l.s4 1983009808
    %v702 = vunpack.c.0.s8 %v701
    %v703 = vlaneseq
    %v704 = vshrl.u32 %v703, 7
    %v705 = vsub.s32 %v702, %v704
    %v706 = vrot.slane %v699, %v705
    %v707 = vcombine.low %v627, %v628
    %v709 = vunpack.c.l.s4 1983009808
    %v710 = vunpack.c.0.s8 %v709
    %v711 = vlaneseq
    %v712 = vshrl.u32 %v711, 7
    %v713 = vsub.s32 %v710, %v712
    %v714 = vrot.slane %v707, %v713
    %v715 = vcombine.low %v619, %v626
    %v717 = vunpack.c.l.s4 1983009808
    %v718 = vunpack.c.0.s8 %v717
    %v719 = vlaneseq
    %v720 = vshrl.u32 %v719, 7
    %v721 = vsub.s32 %v718, %v720
    %v722 = vrot.slane %v715, %v721
    %v723 = vcombine.low %v629, %v630
    %v725 = vunpack.c.l.s4 1983009808
    %v726 = vunpack.c.0.s8 %v725
    %v727 = vlaneseq
    %v728 = vshrl.u32 %v727, 7
    %v729 = vsub.s32 %v726, %v728
    %v730 = vrot.slane %v723, %v729
    %v731 = vcombine.low %v706, %v714
    %v732 = vcombine.high %v706, %v714
    %v734 = vunpack.c.l.s4 1934713408
    %v735 = vunpack.c.0.s8 %v734
    %v736 = vlaneseq
    %v737 = vshrl.u32 %v736, 7
    %v738 = vsub.s32 %v735, %v737
    %v739 = vrot.slane %v731, %v738
    %v741 = vunpack.c.l.s4 1934713408
    %v742 = vunpack.c.0.s8 %v741
    %v743 = vlaneseq
    %v744 = vshrl.u32 %v743, 7
    %v745 = vsub.s32 %v742, %v744
    %v746 = vrot.slane %v732, %v745
    %v747 = vcombine.low %v722, %v730
    %v748 = vcombine.high %v722, %v730
    %v750 = vunpack.c.l.s4 1934713408
    %v751 = vunpack.c.0.s8 %v750
    %v752 = vlaneseq
    %v753 = vshrl.u32 %v752, 7
    %v754 = vsub.s32 %v751, %v753
    %v755 = vrot.slane %v747, %v754
    %v757 = vunpack.c.l.s4 1934713408
    %v758 = vunpack.c.0.s8 %v757
    %v759 = vlaneseq
    %v760 = vshrl.u32 %v759, 7
    %v761 = vsub.s32 %v758, %v760
    %v762 = vrot.slane %v748, %v761
    %v763 = vcombine.low %v739, %v755
    %v764 = vcombine.high %v739, %v755
    %v765 = vcombine.low %v746, %v762
    %v766 = vcombine.high %v746, %v762
    %767 = vrot.lane.b32.xlu0 %v155, 64
    %v768 = vpop.permute.xlu0 %767
    %769 = vrot.lane.b32.xlu0 %v160, 64
    %v770 = vpop.permute.xlu0 %769
    %771 = vrot.lane.b32.xlu0 %v460, 64
    %v772 = vpop.permute.xlu0 %771
    %773 = vrot.lane.b32.xlu0 %v462, 64
    %v774 = vpop.permute.xlu0 %773
    %775 = vrot.lane.b32.xlu0 %v464, 64
    %v776 = vpop.permute.xlu0 %775
    %777 = vrot.lane.b32.xlu0 %v466, 64
    %v778 = vpop.permute.xlu0 %777
    %779 = vrot.lane.b32.xlu0 %v468, 64
    %v780 = vpop.permute.xlu0 %779
    %781 = vrot.lane.b32.xlu0 %v470, 64
    %v782 = vpop.permute.xlu0 %781
    %v791 = vcombine.low %v768, %v776
    %v792 = vcombine.high %v768, %v776
    %v794 = vunpack.c.l.s4 1983009808
    %v795 = vunpack.c.0.s8 %v794
    %v796 = vlaneseq
    %v797 = vshrl.u32 %v796, 7
    %v798 = vsub.s32 %v795, %v797
    %v799 = vrot.slane %v791, %v798
    %v801 = vunpack.c.l.s4 1983009808
    %v802 = vunpack.c.0.s8 %v801
    %v803 = vlaneseq
    %v804 = vshrl.u32 %v803, 7
    %v805 = vsub.s32 %v802, %v804
    %v806 = vrot.slane %v792, %v805
    %v807 = vcombine.low %v772, %v780
    %v808 = vcombine.high %v772, %v780
    %v810 = vunpack.c.l.s4 1983009808
    %v811 = vunpack.c.0.s8 %v810
    %v812 = vlaneseq
    %v813 = vshrl.u32 %v812, 7
    %v814 = vsub.s32 %v811, %v813
    %v815 = vrot.slane %v807, %v814
    %v817 = vunpack.c.l.s4 1983009808
    %v818 = vunpack.c.0.s8 %v817
    %v819 = vlaneseq
    %v820 = vshrl.u32 %v819, 7
    %v821 = vsub.s32 %v818, %v820
    %v822 = vrot.slane %v808, %v821
    %v823 = vcombine.low %v799, %v815
    %v824 = vcombine.high %v799, %v815
    %v826 = vunpack.c.l.s4 1934713408
    %v827 = vunpack.c.0.s8 %v826
    %v828 = vlaneseq
    %v829 = vshrl.u32 %v828, 7
    %v830 = vsub.s32 %v827, %v829
    %v831 = vrot.slane %v823, %v830
    %v833 = vunpack.c.l.s4 1934713408
    %v834 = vunpack.c.0.s8 %v833
    %v835 = vlaneseq
    %v836 = vshrl.u32 %v835, 7
    %v837 = vsub.s32 %v834, %v836
    %v838 = vrot.slane %v824, %v837
    %v839 = vcombine.low %v806, %v822
    %v840 = vcombine.high %v806, %v822
    %v842 = vunpack.c.l.s4 1934713408
    %v843 = vunpack.c.0.s8 %v842
    %v844 = vlaneseq
    %v845 = vshrl.u32 %v844, 7
    %v846 = vsub.s32 %v843, %v845
    %v847 = vrot.slane %v839, %v846
    %v849 = vunpack.c.l.s4 1934713408
    %v850 = vunpack.c.0.s8 %v849
    %v851 = vlaneseq
    %v852 = vshrl.u32 %v851, 7
    %v853 = vsub.s32 %v850, %v852
    %v854 = vrot.slane %v840, %v853
    %v855 = vcombine.high %v831, 0.0
    %v856 = vcombine.high %v838, 0.0
    %v857 = vcombine.high %v847, 0.0
    %v858 = vcombine.high %v854, 0.0
    %v859 = vcombine.low %v770, %v778
    %v860 = vcombine.high %v770, %v778
    %v862 = vunpack.c.l.s4 1983009808
    %v863 = vunpack.c.0.s8 %v862
    %v864 = vlaneseq
    %v865 = vshrl.u32 %v864, 7
    %v866 = vsub.s32 %v863, %v865
    %v867 = vrot.slane %v859, %v866
    %v869 = vunpack.c.l.s4 1983009808
    %v870 = vunpack.c.0.s8 %v869
    %v871 = vlaneseq
    %v872 = vshrl.u32 %v871, 7
    %v873 = vsub.s32 %v870, %v872
    %v874 = vrot.slane %v860, %v873
    %v875 = vcombine.low %v774, %v782
    %v876 = vcombine.high %v774, %v782
    %v878 = vunpack.c.l.s4 1983009808
    %v879 = vunpack.c.0.s8 %v878
    %v880 = vlaneseq
    %v881 = vshrl.u32 %v880, 7
    %v882 = vsub.s32 %v879, %v881
    %v883 = vrot.slane %v875, %v882
    %v885 = vunpack.c.l.s4 1983009808
    %v886 = vunpack.c.0.s8 %v885
    %v887 = vlaneseq
    %v888 = vshrl.u32 %v887, 7
    %v889 = vsub.s32 %v886, %v888
    %v890 = vrot.slane %v876, %v889
    %v891 = vcombine.low %v867, %v883
    %v892 = vcombine.high %v867, %v883
    %v894 = vunpack.c.l.s4 1934713408
    %v895 = vunpack.c.0.s8 %v894
    %v896 = vlaneseq
    %v897 = vshrl.u32 %v896, 7
    %v898 = vsub.s32 %v895, %v897
    %v899 = vrot.slane %v891, %v898
    %v901 = vunpack.c.l.s4 1934713408
    %v902 = vunpack.c.0.s8 %v901
    %v903 = vlaneseq
    %v904 = vshrl.u32 %v903, 7
    %v905 = vsub.s32 %v902, %v904
    %v906 = vrot.slane %v892, %v905
    %v907 = vcombine.low %v874, %v890
    %v908 = vcombine.high %v874, %v890
    %v910 = vunpack.c.l.s4 1934713408
    %v911 = vunpack.c.0.s8 %v910
    %v912 = vlaneseq
    %v913 = vshrl.u32 %v912, 7
    %v914 = vsub.s32 %v911, %v913
    %v915 = vrot.slane %v907, %v914
    %v917 = vunpack.c.l.s4 1934713408
    %v918 = vunpack.c.0.s8 %v917
    %v919 = vlaneseq
    %v920 = vshrl.u32 %v919, 7
    %v921 = vsub.s32 %v918, %v920
    %v922 = vrot.slane %v908, %v921
    %v923 = vcombine.high %v899, 0.0
    %v924 = vcombine.high %v906, 0.0
    %v925 = vcombine.high %v915, 0.0
    %v926 = vcombine.high %v922, 0.0
    %v927 = vcombine.low %v831, %v838
    %v929 = vunpack.c.l.s4 1983009808
    %v930 = vunpack.c.0.s8 %v929
    %v931 = vlaneseq
    %v932 = vshrl.u32 %v931, 7
    %v933 = vsub.s32 %v930, %v932
    %v934 = vrot.slane %v927, %v933
    %v935 = vcombine.low %v855, %v856
    %v937 = vunpack.c.l.s4 1983009808
    %v938 = vunpack.c.0.s8 %v937
    %v939 = vlaneseq
    %v940 = vshrl.u32 %v939, 7
    %v941 = vsub.s32 %v938, %v940
    %v942 = vrot.slane %v935, %v941
    %v943 = vcombine.low %v847, %v854
    %v945 = vunpack.c.l.s4 1983009808
    %v946 = vunpack.c.0.s8 %v945
    %v947 = vlaneseq
    %v948 = vshrl.u32 %v947, 7
    %v949 = vsub.s32 %v946, %v948
    %v950 = vrot.slane %v943, %v949
    %v951 = vcombine.low %v857, %v858
    %v953 = vunpack.c.l.s4 1983009808
    %v954 = vunpack.c.0.s8 %v953
    %v955 = vlaneseq
    %v956 = vshrl.u32 %v955, 7
    %v957 = vsub.s32 %v954, %v956
    %v958 = vrot.slane %v951, %v957
    %v959 = vcombine.low %v934, %v942
    %v960 = vcombine.high %v934, %v942
    %v962 = vunpack.c.l.s4 1934713408
    %v963 = vunpack.c.0.s8 %v962
    %v964 = vlaneseq
    %v965 = vshrl.u32 %v964, 7
    %v966 = vsub.s32 %v963, %v965
    %v967 = vrot.slane %v959, %v966
    %v969 = vunpack.c.l.s4 1934713408
    %v970 = vunpack.c.0.s8 %v969
    %v971 = vlaneseq
    %v972 = vshrl.u32 %v971, 7
    %v973 = vsub.s32 %v970, %v972
    %v974 = vrot.slane %v960, %v973
    %v975 = vcombine.low %v950, %v958
    %v976 = vcombine.high %v950, %v958
    %v978 = vunpack.c.l.s4 1934713408
    %v979 = vunpack.c.0.s8 %v978
    %v980 = vlaneseq
    %v981 = vshrl.u32 %v980, 7
    %v982 = vsub.s32 %v979, %v981
    %v983 = vrot.slane %v975, %v982
    %v985 = vunpack.c.l.s4 1934713408
    %v986 = vunpack.c.0.s8 %v985
    %v987 = vlaneseq
    %v988 = vshrl.u32 %v987, 7
    %v989 = vsub.s32 %v986, %v988
    %v990 = vrot.slane %v976, %v989
    %v991 = vcombine.low %v967, %v983
    %v992 = vcombine.high %v967, %v983
    %v993 = vcombine.low %v974, %v990
    %v994 = vcombine.high %v974, %v990
    %v995 = vcombine.low %v899, %v906
    %v997 = vunpack.c.l.s4 1983009808
    %v998 = vunpack.c.0.s8 %v997
    %v999 = vlaneseq
    %v1000 = vshrl.u32 %v999, 7
    %v1001 = vsub.s32 %v998, %v1000
    %v1002 = vrot.slane %v995, %v1001
    %v1003 = vcombine.low %v923, %v924
    %v1005 = vunpack.c.l.s4 1983009808
    %v1006 = vunpack.c.0.s8 %v1005
    %v1007 = vlaneseq
    %v1008 = vshrl.u32 %v1007, 7
    %v1009 = vsub.s32 %v1006, %v1008
    %v1010 = vrot.slane %v1003, %v1009
    %v1011 = vcombine.low %v915, %v922
    %v1013 = vunpack.c.l.s4 1983009808
    %v1014 = vunpack.c.0.s8 %v1013
    %v1015 = vlaneseq
    %v1016 = vshrl.u32 %v1015, 7
    %v1017 = vsub.s32 %v1014, %v1016
    %v1018 = vrot.slane %v1011, %v1017
    %v1019 = vcombine.low %v925, %v926
    %v1021 = vunpack.c.l.s4 1983009808
    %v1022 = vunpack.c.0.s8 %v1021
    %v1023 = vlaneseq
    %v1024 = vshrl.u32 %v1023, 7
    %v1025 = vsub.s32 %v1022, %v1024
    %v1026 = vrot.slane %v1019, %v1025
    %v1027 = vcombine.low %v1002, %v1010
    %v1028 = vcombine.high %v1002, %v1010
    %v1030 = vunpack.c.l.s4 1934713408
    %v1031 = vunpack.c.0.s8 %v1030
    %v1032 = vlaneseq
    %v1033 = vshrl.u32 %v1032, 7
    %v1034 = vsub.s32 %v1031, %v1033
    %v1035 = vrot.slane %v1027, %v1034
    %v1037 = vunpack.c.l.s4 1934713408
    %v1038 = vunpack.c.0.s8 %v1037
    %v1039 = vlaneseq
    %v1040 = vshrl.u32 %v1039, 7
    %v1041 = vsub.s32 %v1038, %v1040
    %v1042 = vrot.slane %v1028, %v1041
    %v1043 = vcombine.low %v1018, %v1026
    %v1044 = vcombine.high %v1018, %v1026
    %v1046 = vunpack.c.l.s4 1934713408
    %v1047 = vunpack.c.0.s8 %v1046
    %v1048 = vlaneseq
    %v1049 = vshrl.u32 %v1048, 7
    %v1050 = vsub.s32 %v1047, %v1049
    %v1051 = vrot.slane %v1043, %v1050
    %v1053 = vunpack.c.l.s4 1934713408
    %v1054 = vunpack.c.0.s8 %v1053
    %v1055 = vlaneseq
    %v1056 = vshrl.u32 %v1055, 7
    %v1057 = vsub.s32 %v1054, %v1056
    %v1058 = vrot.slane %v1044, %v1057
    %v1059 = vcombine.low %v1035, %v1051
    %v1060 = vcombine.high %v1035, %v1051
    %v1061 = vcombine.low %v1042, %v1058
    %v1062 = vcombine.high %v1042, %v1058
    %vm1063 = vcmask 64512
    %v1065 = vsel %vm1063, %v385, 0
    %v1068 = vsel %vm1063, %v695, 0
    %1070 = vmatprep.subr.mxu0 0.0
    %1071 = vmatpush1.xpose.msra.mxu0 %v1068
    %1072 = vmatprep.subr.mxu0 0.0
    %1073 = vmatpush1.xpose.msra.mxu0 0.0
    %1074 = vmatprep.subr.mxu0 0.0
    %1075 = vmatpush1.xpose.msra.mxu0 0.0
    %1076 = vmatprep.subr.mxu0 0.0
    %1077 = vmatpush1.xpose.msra.mxu0 0.0
    %1078 = vmatprep.subr.mxu0 0.0
    %1079 = vmatpush1.xpose.msra.mxu0 0.0
    %1080 = vmatprep.subr.mxu0 0.0
    %1081 = vmatpush1.xpose.msra.mxu0 0.0
    %1082 = vmatprep.subr.mxu0 0.0
    %1083 = vmatpush1.xpose.msra.mxu0 0.0
    %1084 = vmatprep.subr.mxu0 0.0
    %1085 = vmatpush1.xpose.msra.mxu0 0.0
    %1086 = vmatprep.subr.mxu0 0.0
    %1087 = vmatpush1.xpose.msra.mxu0 0.0
    %1088 = vmatprep.subr.mxu0 0.0
    %1089 = vmatpush1.xpose.msra.mxu0 0.0
    %1090 = vmatprep.subr.mxu0 0.0
    %1091 = vmatpush1.xpose.msra.mxu0 0.0
    %1092 = vmatprep.subr.mxu0 0.0
    %1093 = vmatpush1.xpose.msra.mxu0 0.0
    %1094 = vmatprep.subr.mxu0 0.0
    %1095 = vmatpush1.xpose.msra.mxu0 0.0
    %1096 = vmatprep.subr.mxu0 0.0
    %1097 = vmatpush1.xpose.msra.mxu0 0.0
    %1098 = vmatprep.subr.mxu0 0.0
    %1099 = vmatpush1.xpose.msra.mxu0 0.0
    %1100 = vmatprep.subr.mxu0 0.0
    %1101 = vmatpush1.xpose.msra.mxu0 0.0
    %1102 = vmatprep.subr.mxu0 0.0
    %1103 = vmatpush1.xpose.msra.mxu0 0.0
    %1104 = vmatprep.subr.mxu0 0.0
    %1105 = vmatpush1.xpose.msra.mxu0 0.0
    %1106 = vmatprep.subr.mxu0 0.0
    %1107 = vmatpush1.xpose.msra.mxu0 0.0
    %1108 = vmatprep.subr.mxu0 0.0
    %1109 = vmatpush1.xpose.msra.mxu0 0.0
    %1110 = vmatprep.subr.mxu0 0.0
    %1111 = vmatpush1.xpose.msra.mxu0 0.0
    %1112 = vmatprep.subr.mxu0 0.0
    %1113 = vmatpush1.xpose.msra.mxu0 0.0
    %1114 = vmatprep.subr.mxu0 0.0
    %1115 = vmatpush1.xpose.msra.mxu0 0.0
    %1116 = vmatprep.subr.mxu0 0.0
    %1117 = vmatpush1.xpose.msra.mxu0 0.0
    %1118 = vmatprep.subr.mxu0 0.0
    %1119 = vmatpush1.xpose.msra.mxu0 0.0
    %1120 = vmatprep.subr.mxu0 0.0
    %1121 = vmatpush1.xpose.msra.mxu0 0.0
    %1122 = vmatprep.subr.mxu0 0.0
    %1123 = vmatpush1.xpose.msra.mxu0 0.0
    %1124 = vmatprep.subr.mxu0 0.0
    %1125 = vmatpush1.xpose.msra.mxu0 0.0
    %1126 = vmatprep.subr.mxu0 0.0
    %1127 = vmatpush1.xpose.msra.mxu0 0.0
    %1128 = vmatprep.subr.mxu0 0.0
    %1129 = vmatpush1.xpose.msra.mxu0 0.0
    %1130 = vmatprep.subr.mxu0 0.0
    %1131 = vmatpush1.xpose.msra.mxu0 0.0
    %1132 = vmatprep.subr.mxu0 0.0
    %1133 = vmatpush1.xpose.msra.mxu0 0.0
    %1134 = vmatprep.mubr.f32.mxu0 0.0
    %1135 = vmatmul.mubr.f32.gmra.mrb[0].mxu0 %v1065
    %v1136 = vpop.f32.mrb[0].mxu0
    %v1137 = vadd.f32 0.0, %v1136
    %v1138 = vpop.f32.mrb[0].mxu0
    %1139 = vdwg.mxu0
    %v1141 = vsel %vm1063, %v386, 0
    %v1144 = vsel %vm1063, %v696, 0
    %1146 = vmatprep.subr.mxu0 0.0
    %1147 = vmatpush1.xpose.msra.mxu0 %v1144
    %1148 = vmatprep.subr.mxu0 0.0
    %1149 = vmatpush1.xpose.msra.mxu0 0.0
    %1150 = vmatprep.subr.mxu0 0.0
    %1151 = vmatpush1.xpose.msra.mxu0 0.0
    %1152 = vmatprep.subr.mxu0 0.0
    %1153 = vmatpush1.xpose.msra.mxu0 0.0
    %1154 = vmatprep.subr.mxu0 0.0
    %1155 = vmatpush1.xpose.msra.mxu0 0.0
    %1156 = vmatprep.subr.mxu0 0.0
    %1157 = vmatpush1.xpose.msra.mxu0 0.0
    %1158 = vmatprep.subr.mxu0 0.0
    %1159 = vmatpush1.xpose.msra.mxu0 0.0
    %1160 = vmatprep.subr.mxu0 0.0
    %1161 = vmatpush1.xpose.msra.mxu0 0.0
    %1162 = vmatprep.subr.mxu0 0.0
    %1163 = vmatpush1.xpose.msra.mxu0 0.0
    %1164 = vmatprep.subr.mxu0 0.0
    %1165 = vmatpush1.xpose.msra.mxu0 0.0
    %1166 = vmatprep.subr.mxu0 0.0
    %1167 = vmatpush1.xpose.msra.mxu0 0.0
    %1168 = vmatprep.subr.mxu0 0.0
    %1169 = vmatpush1.xpose.msra.mxu0 0.0
    %1170 = vmatprep.subr.mxu0 0.0
    %1171 = vmatpush1.xpose.msra.mxu0 0.0
    %1172 = vmatprep.subr.mxu0 0.0
    %1173 = vmatpush1.xpose.msra.mxu0 0.0
    %1174 = vmatprep.subr.mxu0 0.0
    %1175 = vmatpush1.xpose.msra.mxu0 0.0
    %1176 = vmatprep.subr.mxu0 0.0
    %1177 = vmatpush1.xpose.msra.mxu0 0.0
    %1178 = vmatprep.subr.mxu0 0.0
    %1179 = vmatpush1.xpose.msra.mxu0 0.0
    %1180 = vmatprep.subr.mxu0 0.0
    %1181 = vmatpush1.xpose.msra.mxu0 0.0
    %1182 = vmatprep.subr.mxu0 0.0
    %1183 = vmatpush1.xpose.msra.mxu0 0.0
    %1184 = vmatprep.subr.mxu0 0.0
    %1185 = vmatpush1.xpose.msra.mxu0 0.0
    %1186 = vmatprep.subr.mxu0 0.0
    %1187 = vmatpush1.xpose.msra.mxu0 0.0
    %1188 = vmatprep.subr.mxu0 0.0
    %1189 = vmatpush1.xpose.msra.mxu0 0.0
    %1190 = vmatprep.subr.mxu0 0.0
    %1191 = vmatpush1.xpose.msra.mxu0 0.0
    %1192 = vmatprep.subr.mxu0 0.0
    %1193 = vmatpush1.xpose.msra.mxu0 0.0
    %1194 = vmatprep.subr.mxu0 0.0
    %1195 = vmatpush1.xpose.msra.mxu0 0.0
    %1196 = vmatprep.subr.mxu0 0.0
    %1197 = vmatpush1.xpose.msra.mxu0 0.0
    %1198 = vmatprep.subr.mxu0 0.0
    %1199 = vmatpush1.xpose.msra.mxu0 0.0
    %1200 = vmatprep.subr.mxu0 0.0
    %1201 = vmatpush1.xpose.msra.mxu0 0.0
    %1202 = vmatprep.subr.mxu0 0.0
    %1203 = vmatpush1.xpose.msra.mxu0 0.0
    %1204 = vmatprep.subr.mxu0 0.0
    %1205 = vmatpush1.xpose.msra.mxu0 0.0
    %1206 = vmatprep.subr.mxu0 0.0
    %1207 = vmatpush1.xpose.msra.mxu0 0.0
    %1208 = vmatprep.subr.mxu0 0.0
    %1209 = vmatpush1.xpose.msra.mxu0 0.0
    %1210 = vmatprep.mubr.f32.mxu0 0.0
    %1211 = vmatmul.mubr.f32.gmra.mrb[0].mxu0 %v1141
    %v1212 = vpop.f32.mrb[0].mxu0
    %v1213 = vadd.f32 0.0, %v1212
    %v1214 = vpop.f32.mrb[0].mxu0
    %1215 = vdwg.mxu0
    %v1217 = vsel %vm1063, %v387, 0
    %v1220 = vsel %vm1063, %v697, 0
    %1222 = vmatprep.subr.mxu0 0.0
    %1223 = vmatpush1.xpose.msra.mxu0 %v1220
    %1224 = vmatprep.subr.mxu0 0.0
    %1225 = vmatpush1.xpose.msra.mxu0 0.0
    %1226 = vmatprep.subr.mxu0 0.0
    %1227 = vmatpush1.xpose.msra.mxu0 0.0
    %1228 = vmatprep.subr.mxu0 0.0
    %1229 = vmatpush1.xpose.msra.mxu0 0.0
    %1230 = vmatprep.subr.mxu0 0.0
    %1231 = vmatpush1.xpose.msra.mxu0 0.0
    %1232 = vmatprep.subr.mxu0 0.0
    %1233 = vmatpush1.xpose.msra.mxu0 0.0
    %1234 = vmatprep.subr.mxu0 0.0
    %1235 = vmatpush1.xpose.msra.mxu0 0.0
    %1236 = vmatprep.subr.mxu0 0.0
    %1237 = vmatpush1.xpose.msra.mxu0 0.0
    %1238 = vmatprep.subr.mxu0 0.0
    %1239 = vmatpush1.xpose.msra.mxu0 0.0
    %1240 = vmatprep.subr.mxu0 0.0
    %1241 = vmatpush1.xpose.msra.mxu0 0.0
    %1242 = vmatprep.subr.mxu0 0.0
    %1243 = vmatpush1.xpose.msra.mxu0 0.0
    %1244 = vmatprep.subr.mxu0 0.0
    %1245 = vmatpush1.xpose.msra.mxu0 0.0
    %1246 = vmatprep.subr.mxu0 0.0
    %1247 = vmatpush1.xpose.msra.mxu0 0.0
    %1248 = vmatprep.subr.mxu0 0.0
    %1249 = vmatpush1.xpose.msra.mxu0 0.0
    %1250 = vmatprep.subr.mxu0 0.0
    %1251 = vmatpush1.xpose.msra.mxu0 0.0
    %1252 = vmatprep.subr.mxu0 0.0
    %1253 = vmatpush1.xpose.msra.mxu0 0.0
    %1254 = vmatprep.subr.mxu0 0.0
    %1255 = vmatpush1.xpose.msra.mxu0 0.0
    %1256 = vmatprep.subr.mxu0 0.0
    %1257 = vmatpush1.xpose.msra.mxu0 0.0
    %1258 = vmatprep.subr.mxu0 0.0
    %1259 = vmatpush1.xpose.msra.mxu0 0.0
    %1260 = vmatprep.subr.mxu0 0.0
    %1261 = vmatpush1.xpose.msra.mxu0 0.0
    %1262 = vmatprep.subr.mxu0 0.0
    %1263 = vmatpush1.xpose.msra.mxu0 0.0
    %1264 = vmatprep.subr.mxu0 0.0
    %1265 = vmatpush1.xpose.msra.mxu0 0.0
    %1266 = vmatprep.subr.mxu0 0.0
    %1267 = vmatpush1.xpose.msra.mxu0 0.0
    %1268 = vmatprep.subr.mxu0 0.0
    %1269 = vmatpush1.xpose.msra.mxu0 0.0
    %1270 = vmatprep.subr.mxu0 0.0
    %1271 = vmatpush1.xpose.msra.mxu0 0.0
    %1272 = vmatprep.subr.mxu0 0.0
    %1273 = vmatpush1.xpose.msra.mxu0 0.0
    %1274 = vmatprep.subr.mxu0 0.0
    %1275 = vmatpush1.xpose.msra.mxu0 0.0
    %1276 = vmatprep.subr.mxu0 0.0
    %1277 = vmatpush1.xpose.msra.mxu0 0.0
    %1278 = vmatprep.subr.mxu0 0.0
    %1279 = vmatpush1.xpose.msra.mxu0 0.0
    %1280 = vmatprep.subr.mxu0 0.0
    %1281 = vmatpush1.xpose.msra.mxu0 0.0
    %1282 = vmatprep.subr.mxu0 0.0
    %1283 = vmatpush1.xpose.msra.mxu0 0.0
    %1284 = vmatprep.subr.mxu0 0.0
    %1285 = vmatpush1.xpose.msra.mxu0 0.0
    %1286 = vmatprep.mubr.f32.mxu0 0.0
    %1287 = vmatmul.mubr.f32.gmra.mrb[0].mxu0 %v1217
    %v1288 = vpop.f32.mrb[0].mxu0
    %v1289 = vadd.f32 0.0, %v1288
    %v1290 = vpop.f32.mrb[0].mxu0
    %1291 = vdwg.mxu0
    %v1293 = vsel %vm1063, %v388, 0
    %v1296 = vsel %vm1063, %v698, 0
    %1298 = vmatprep.subr.mxu0 0.0
    %1299 = vmatpush1.xpose.msra.mxu0 %v1296
    %1300 = vmatprep.subr.mxu0 0.0
    %1301 = vmatpush1.xpose.msra.mxu0 0.0
    %1302 = vmatprep.subr.mxu0 0.0
    %1303 = vmatpush1.xpose.msra.mxu0 0.0
    %1304 = vmatprep.subr.mxu0 0.0
    %1305 = vmatpush1.xpose.msra.mxu0 0.0
    %1306 = vmatprep.subr.mxu0 0.0
    %1307 = vmatpush1.xpose.msra.mxu0 0.0
    %1308 = vmatprep.subr.mxu0 0.0
    %1309 = vmatpush1.xpose.msra.mxu0 0.0
    %1310 = vmatprep.subr.mxu0 0.0
    %1311 = vmatpush1.xpose.msra.mxu0 0.0
    %1312 = vmatprep.subr.mxu0 0.0
    %1313 = vmatpush1.xpose.msra.mxu0 0.0
    %1314 = vmatprep.subr.mxu0 0.0
    %1315 = vmatpush1.xpose.msra.mxu0 0.0
    %1316 = vmatprep.subr.mxu0 0.0
    %1317 = vmatpush1.xpose.msra.mxu0 0.0
    %1318 = vmatprep.subr.mxu0 0.0
    %1319 = vmatpush1.xpose.msra.mxu0 0.0
    %1320 = vmatprep.subr.mxu0 0.0
    %1321 = vmatpush1.xpose.msra.mxu0 0.0
    %1322 = vmatprep.subr.mxu0 0.0
    %1323 = vmatpush1.xpose.msra.mxu0 0.0
    %1324 = vmatprep.subr.mxu0 0.0
    %1325 = vmatpush1.xpose.msra.mxu0 0.0
    %1326 = vmatprep.subr.mxu0 0.0
    %1327 = vmatpush1.xpose.msra.mxu0 0.0
    %1328 = vmatprep.subr.mxu0 0.0
    %1329 = vmatpush1.xpose.msra.mxu0 0.0
    %1330 = vmatprep.subr.mxu0 0.0
    %1331 = vmatpush1.xpose.msra.mxu0 0.0
    %1332 = vmatprep.subr.mxu0 0.0
    %1333 = vmatpush1.xpose.msra.mxu0 0.0
    %1334 = vmatprep.subr.mxu0 0.0
    %1335 = vmatpush1.xpose.msra.mxu0 0.0
    %1336 = vmatprep.subr.mxu0 0.0
    %1337 = vmatpush1.xpose.msra.mxu0 0.0
    %1338 = vmatprep.subr.mxu0 0.0
    %1339 = vmatpush1.xpose.msra.mxu0 0.0
    %1340 = vmatprep.subr.mxu0 0.0
    %1341 = vmatpush1.xpose.msra.mxu0 0.0
    %1342 = vmatprep.subr.mxu0 0.0
    %1343 = vmatpush1.xpose.msra.mxu0 0.0
    %1344 = vmatprep.subr.mxu0 0.0
    %1345 = vmatpush1.xpose.msra.mxu0 0.0
    %1346 = vmatprep.subr.mxu0 0.0
    %1347 = vmatpush1.xpose.msra.mxu0 0.0
    %1348 = vmatprep.subr.mxu0 0.0
    %1349 = vmatpush1.xpose.msra.mxu0 0.0
    %1350 = vmatprep.subr.mxu0 0.0
    %1351 = vmatpush1.xpose.msra.mxu0 0.0
    %1352 = vmatprep.subr.mxu0 0.0
    %1353 = vmatpush1.xpose.msra.mxu0 0.0
    %1354 = vmatprep.subr.mxu0 0.0
    %1355 = vmatpush1.xpose.msra.mxu0 0.0
    %1356 = vmatprep.subr.mxu0 0.0
    %1357 = vmatpush1.xpose.msra.mxu0 0.0
    %1358 = vmatprep.subr.mxu0 0.0
    %1359 = vmatpush1.xpose.msra.mxu0 0.0
    %1360 = vmatprep.subr.mxu0 0.0
    %1361 = vmatpush1.xpose.msra.mxu0 0.0
    %1362 = vmatprep.mubr.f32.mxu0 0.0
    %1363 = vmatmul.mubr.f32.gmra.mrb[0].mxu0 %v1293
    %v1364 = vpop.f32.mrb[0].mxu0
    %v1365 = vadd.f32 0.0, %v1364
    %v1366 = vpop.f32.mrb[0].mxu0
    %1367 = vdwg.mxu0
    %v1369 = vsel %vm1063, %v453, 0
    %v1372 = vsel %vm1063, %v763, 0
    %1374 = vmatprep.subr.mxu0 0.0
    %1375 = vmatpush1.xpose.msra.mxu0 %v1372
    %1376 = vmatprep.subr.mxu0 0.0
    %1377 = vmatpush1.xpose.msra.mxu0 0.0
    %1378 = vmatprep.subr.mxu0 0.0
    %1379 = vmatpush1.xpose.msra.mxu0 0.0
    %1380 = vmatprep.subr.mxu0 0.0
    %1381 = vmatpush1.xpose.msra.mxu0 0.0
    %1382 = vmatprep.subr.mxu0 0.0
    %1383 = vmatpush1.xpose.msra.mxu0 0.0
    %1384 = vmatprep.subr.mxu0 0.0
    %1385 = vmatpush1.xpose.msra.mxu0 0.0
    %1386 = vmatprep.subr.mxu0 0.0
    %1387 = vmatpush1.xpose.msra.mxu0 0.0
    %1388 = vmatprep.subr.mxu0 0.0
    %1389 = vmatpush1.xpose.msra.mxu0 0.0
    %1390 = vmatprep.subr.mxu0 0.0
    %1391 = vmatpush1.xpose.msra.mxu0 0.0
    %1392 = vmatprep.subr.mxu0 0.0
    %1393 = vmatpush1.xpose.msra.mxu0 0.0
    %1394 = vmatprep.subr.mxu0 0.0
    %1395 = vmatpush1.xpose.msra.mxu0 0.0
    %1396 = vmatprep.subr.mxu0 0.0
    %1397 = vmatpush1.xpose.msra.mxu0 0.0
    %1398 = vmatprep.subr.mxu0 0.0
    %1399 = vmatpush1.xpose.msra.mxu0 0.0
    %1400 = vmatprep.subr.mxu0 0.0
    %1401 = vmatpush1.xpose.msra.mxu0 0.0
    %1402 = vmatprep.subr.mxu0 0.0
    %1403 = vmatpush1.xpose.msra.mxu0 0.0
    %1404 = vmatprep.subr.mxu0 0.0
    %1405 = vmatpush1.xpose.msra.mxu0 0.0
    %1406 = vmatprep.subr.mxu0 0.0
    %1407 = vmatpush1.xpose.msra.mxu0 0.0
    %1408 = vmatprep.subr.mxu0 0.0
    %1409 = vmatpush1.xpose.msra.mxu0 0.0
    %1410 = vmatprep.subr.mxu0 0.0
    %1411 = vmatpush1.xpose.msra.mxu0 0.0
    %1412 = vmatprep.subr.mxu0 0.0
    %1413 = vmatpush1.xpose.msra.mxu0 0.0
    %1414 = vmatprep.subr.mxu0 0.0
    %1415 = vmatpush1.xpose.msra.mxu0 0.0
    %1416 = vmatprep.subr.mxu0 0.0
    %1417 = vmatpush1.xpose.msra.mxu0 0.0
    %1418 = vmatprep.subr.mxu0 0.0
    %1419 = vmatpush1.xpose.msra.mxu0 0.0
    %1420 = vmatprep.subr.mxu0 0.0
    %1421 = vmatpush1.xpose.msra.mxu0 0.0
    %1422 = vmatprep.subr.mxu0 0.0
    %1423 = vmatpush1.xpose.msra.mxu0 0.0
    %1424 = vmatprep.subr.mxu0 0.0
    %1425 = vmatpush1.xpose.msra.mxu0 0.0
    %1426 = vmatprep.subr.mxu0 0.0
    %1427 = vmatpush1.xpose.msra.mxu0 0.0
    %1428 = vmatprep.subr.mxu0 0.0
    %1429 = vmatpush1.xpose.msra.mxu0 0.0
    %1430 = vmatprep.subr.mxu0 0.0
    %1431 = vmatpush1.xpose.msra.mxu0 0.0
    %1432 = vmatprep.subr.mxu0 0.0
    %1433 = vmatpush1.xpose.msra.mxu0 0.0
    %1434 = vmatprep.subr.mxu0 0.0
    %1435 = vmatpush1.xpose.msra.mxu0 0.0
    %1436 = vmatprep.subr.mxu0 0.0
    %1437 = vmatpush1.xpose.msra.mxu0 0.0
    %1438 = vmatprep.mubr.f32.mxu0 0.0
    %1439 = vmatmul.mubr.f32.gmra.mrb[0].mxu0 %v1369
    %v1440 = vpop.f32.mrb[0].mxu0
    %v1441 = vadd.f32 0.0, %v1440
    %v1442 = vpop.f32.mrb[0].mxu0
    %1443 = vdwg.mxu0
    %v1445 = vsel %vm1063, %v454, 0
    %v1448 = vsel %vm1063, %v764, 0
    %1450 = vmatprep.subr.mxu0 0.0
    %1451 = vmatpush1.xpose.msra.mxu0 %v1448
    %1452 = vmatprep.subr.mxu0 0.0
    %1453 = vmatpush1.xpose.msra.mxu0 0.0
    %1454 = vmatprep.subr.mxu0 0.0
    %1455 = vmatpush1.xpose.msra.mxu0 0.0
    %1456 = vmatprep.subr.mxu0 0.0
    %1457 = vmatpush1.xpose.msra.mxu0 0.0
    %1458 = vmatprep.subr.mxu0 0.0
    %1459 = vmatpush1.xpose.msra.mxu0 0.0
    %1460 = vmatprep.subr.mxu0 0.0
    %1461 = vmatpush1.xpose.msra.mxu0 0.0
    %1462 = vmatprep.subr.mxu0 0.0
    %1463 = vmatpush1.xpose.msra.mxu0 0.0
    %1464 = vmatprep.subr.mxu0 0.0
    %1465 = vmatpush1.xpose.msra.mxu0 0.0
    %1466 = vmatprep.subr.mxu0 0.0
    %1467 = vmatpush1.xpose.msra.mxu0 0.0
    %1468 = vmatprep.subr.mxu0 0.0
    %1469 = vmatpush1.xpose.msra.mxu0 0.0
    %1470 = vmatprep.subr.mxu0 0.0
    %1471 = vmatpush1.xpose.msra.mxu0 0.0
    %1472 = vmatprep.subr.mxu0 0.0
    %1473 = vmatpush1.xpose.msra.mxu0 0.0
    %1474 = vmatprep.subr.mxu0 0.0
    %1475 = vmatpush1.xpose.msra.mxu0 0.0
    %1476 = vmatprep.subr.mxu0 0.0
    %1477 = vmatpush1.xpose.msra.mxu0 0.0
    %1478 = vmatprep.subr.mxu0 0.0
    %1479 = vmatpush1.xpose.msra.mxu0 0.0
    %1480 = vmatprep.subr.mxu0 0.0
    %1481 = vmatpush1.xpose.msra.mxu0 0.0
    %1482 = vmatprep.subr.mxu0 0.0
    %1483 = vmatpush1.xpose.msra.mxu0 0.0
    %1484 = vmatprep.subr.mxu0 0.0
    %1485 = vmatpush1.xpose.msra.mxu0 0.0
    %1486 = vmatprep.subr.mxu0 0.0
    %1487 = vmatpush1.xpose.msra.mxu0 0.0
    %1488 = vmatprep.subr.mxu0 0.0
    %1489 = vmatpush1.xpose.msra.mxu0 0.0
    %1490 = vmatprep.subr.mxu0 0.0
    %1491 = vmatpush1.xpose.msra.mxu0 0.0
    %1492 = vmatprep.subr.mxu0 0.0
    %1493 = vmatpush1.xpose.msra.mxu0 0.0
    %1494 = vmatprep.subr.mxu0 0.0
    %1495 = vmatpush1.xpose.msra.mxu0 0.0
    %1496 = vmatprep.subr.mxu0 0.0
    %1497 = vmatpush1.xpose.msra.mxu0 0.0
    %1498 = vmatprep.subr.mxu0 0.0
    %1499 = vmatpush1.xpose.msra.mxu0 0.0
    %1500 = vmatprep.subr.mxu0 0.0
    %1501 = vmatpush1.xpose.msra.mxu0 0.0
    %1502 = vmatprep.subr.mxu0 0.0
    %1503 = vmatpush1.xpose.msra.mxu0 0.0
    %1504 = vmatprep.subr.mxu0 0.0
    %1505 = vmatpush1.xpose.msra.mxu0 0.0
    %1506 = vmatprep.subr.mxu0 0.0
    %1507 = vmatpush1.xpose.msra.mxu0 0.0
    %1508 = vmatprep.subr.mxu0 0.0
    %1509 = vmatpush1.xpose.msra.mxu0 0.0
    %1510 = vmatprep.subr.mxu0 0.0
    %1511 = vmatpush1.xpose.msra.mxu0 0.0
    %1512 = vmatprep.subr.mxu0 0.0
    %1513 = vmatpush1.xpose.msra.mxu0 0.0
    %1514 = vmatprep.mubr.f32.mxu0 0.0
    %1515 = vmatmul.mubr.f32.gmra.mrb[0].mxu0 %v1445
    %v1516 = vpop.f32.mrb[0].mxu0
    %v1517 = vadd.f32 0.0, %v1516
    %v1518 = vpop.f32.mrb[0].mxu0
    %1519 = vdwg.mxu0
    %v1521 = vsel %vm1063, %v455, 0
    %v1524 = vsel %vm1063, %v765, 0
    %1526 = vmatprep.subr.mxu0 0.0
    %1527 = vmatpush1.xpose.msra.mxu0 %v1524
    %1528 = vmatprep.subr.mxu0 0.0
    %1529 = vmatpush1.xpose.msra.mxu0 0.0
    %1530 = vmatprep.subr.mxu0 0.0
    %1531 = vmatpush1.xpose.msra.mxu0 0.0
    %1532 = vmatprep.subr.mxu0 0.0
    %1533 = vmatpush1.xpose.msra.mxu0 0.0
    %1534 = vmatprep.subr.mxu0 0.0
    %1535 = vmatpush1.xpose.msra.mxu0 0.0
    %1536 = vmatprep.subr.mxu0 0.0
    %1537 = vmatpush1.xpose.msra.mxu0 0.0
    %1538 = vmatprep.subr.mxu0 0.0
    %1539 = vmatpush1.xpose.msra.mxu0 0.0
    %1540 = vmatprep.subr.mxu0 0.0
    %1541 = vmatpush1.xpose.msra.mxu0 0.0
    %1542 = vmatprep.subr.mxu0 0.0
    %1543 = vmatpush1.xpose.msra.mxu0 0.0
    %1544 = vmatprep.subr.mxu0 0.0
    %1545 = vmatpush1.xpose.msra.mxu0 0.0
    %1546 = vmatprep.subr.mxu0 0.0
    %1547 = vmatpush1.xpose.msra.mxu0 0.0
    %1548 = vmatprep.subr.mxu0 0.0
    %1549 = vmatpush1.xpose.msra.mxu0 0.0
    %1550 = vmatprep.subr.mxu0 0.0
    %1551 = vmatpush1.xpose.msra.mxu0 0.0
    %1552 = vmatprep.subr.mxu0 0.0
    %1553 = vmatpush1.xpose.msra.mxu0 0.0
    %1554 = vmatprep.subr.mxu0 0.0
    %1555 = vmatpush1.xpose.msra.mxu0 0.0
    %1556 = vmatprep.subr.mxu0 0.0
    %1557 = vmatpush1.xpose.msra.mxu0 0.0
    %1558 = vmatprep.subr.mxu0 0.0
    %1559 = vmatpush1.xpose.msra.mxu0 0.0
    %1560 = vmatprep.subr.mxu0 0.0
    %1561 = vmatpush1.xpose.msra.mxu0 0.0
    %1562 = vmatprep.subr.mxu0 0.0
    %1563 = vmatpush1.xpose.msra.mxu0 0.0
    %1564 = vmatprep.subr.mxu0 0.0
    %1565 = vmatpush1.xpose.msra.mxu0 0.0
    %1566 = vmatprep.subr.mxu0 0.0
    %1567 = vmatpush1.xpose.msra.mxu0 0.0
    %1568 = vmatprep.subr.mxu0 0.0
    %1569 = vmatpush1.xpose.msra.mxu0 0.0
    %1570 = vmatprep.subr.mxu0 0.0
    %1571 = vmatpush1.xpose.msra.mxu0 0.0
    %1572 = vmatprep.subr.mxu0 0.0
    %1573 = vmatpush1.xpose.msra.mxu0 0.0
    %1574 = vmatprep.subr.mxu0 0.0
    %1575 = vmatpush1.xpose.msra.mxu0 0.0
    %1576 = vmatprep.subr.mxu0 0.0
    %1577 = vmatpush1.xpose.msra.mxu0 0.0
    %1578 = vmatprep.subr.mxu0 0.0
    %1579 = vmatpush1.xpose.msra.mxu0 0.0
    %1580 = vmatprep.subr.mxu0 0.0
    %1581 = vmatpush1.xpose.msra.mxu0 0.0
    %1582 = vmatprep.subr.mxu0 0.0
    %1583 = vmatpush1.xpose.msra.mxu0 0.0
    %1584 = vmatprep.subr.mxu0 0.0
    %1585 = vmatpush1.xpose.msra.mxu0 0.0
    %1586 = vmatprep.subr.mxu0 0.0
    %1587 = vmatpush1.xpose.msra.mxu0 0.0
    %1588 = vmatprep.subr.mxu0 0.0
    %1589 = vmatpush1.xpose.msra.mxu0 0.0
    %1590 = vmatprep.mubr.f32.mxu0 0.0
    %1591 = vmatmul.mubr.f32.gmra.mrb[0].mxu0 %v1521
    %v1592 = vpop.f32.mrb[0].mxu0
    %v1593 = vadd.f32 0.0, %v1592
    %v1594 = vpop.f32.mrb[0].mxu0
    %1595 = vdwg.mxu0
    %v1597 = vsel %vm1063, %v456, 0
    %v1600 = vsel %vm1063, %v766, 0
    %1602 = vmatprep.subr.mxu0 0.0
    %1603 = vmatpush1.xpose.msra.mxu0 %v1600
    %1604 = vmatprep.subr.mxu0 0.0
    %1605 = vmatpush1.xpose.msra.mxu0 0.0
    %1606 = vmatprep.subr.mxu0 0.0
    %1607 = vmatpush1.xpose.msra.mxu0 0.0
    %1608 = vmatprep.subr.mxu0 0.0
    %1609 = vmatpush1.xpose.msra.mxu0 0.0
    %1610 = vmatprep.subr.mxu0 0.0
    %1611 = vmatpush1.xpose.msra.mxu0 0.0
    %1612 = vmatprep.subr.mxu0 0.0
    %1613 = vmatpush1.xpose.msra.mxu0 0.0
    %1614 = vmatprep.subr.mxu0 0.0
    %1615 = vmatpush1.xpose.msra.mxu0 0.0
    %1616 = vmatprep.subr.mxu0 0.0
    %1617 = vmatpush1.xpose.msra.mxu0 0.0
    %1618 = vmatprep.subr.mxu0 0.0
    %1619 = vmatpush1.xpose.msra.mxu0 0.0
    %1620 = vmatprep.subr.mxu0 0.0
    %1621 = vmatpush1.xpose.msra.mxu0 0.0
    %1622 = vmatprep.subr.mxu0 0.0
    %1623 = vmatpush1.xpose.msra.mxu0 0.0
    %1624 = vmatprep.subr.mxu0 0.0
    %1625 = vmatpush1.xpose.msra.mxu0 0.0
    %1626 = vmatprep.subr.mxu0 0.0
    %1627 = vmatpush1.xpose.msra.mxu0 0.0
    %1628 = vmatprep.subr.mxu0 0.0
    %1629 = vmatpush1.xpose.msra.mxu0 0.0
    %1630 = vmatprep.subr.mxu0 0.0
    %1631 = vmatpush1.xpose.msra.mxu0 0.0
    %1632 = vmatprep.subr.mxu0 0.0
    %1633 = vmatpush1.xpose.msra.mxu0 0.0
    %1634 = vmatprep.subr.mxu0 0.0
    %1635 = vmatpush1.xpose.msra.mxu0 0.0
    %1636 = vmatprep.subr.mxu0 0.0
    %1637 = vmatpush1.xpose.msra.mxu0 0.0
    %1638 = vmatprep.subr.mxu0 0.0
    %1639 = vmatpush1.xpose.msra.mxu0 0.0
    %1640 = vmatprep.subr.mxu0 0.0
    %1641 = vmatpush1.xpose.msra.mxu0 0.0
    %1642 = vmatprep.subr.mxu0 0.0
    %1643 = vmatpush1.xpose.msra.mxu0 0.0
    %1644 = vmatprep.subr.mxu0 0.0
    %1645 = vmatpush1.xpose.msra.mxu0 0.0
    %1646 = vmatprep.subr.mxu0 0.0
    %1647 = vmatpush1.xpose.msra.mxu0 0.0
    %1648 = vmatprep.subr.mxu0 0.0
    %1649 = vmatpush1.xpose.msra.mxu0 0.0
    %1650 = vmatprep.subr.mxu0 0.0
    %1651 = vmatpush1.xpose.msra.mxu0 0.0
    %1652 = vmatprep.subr.mxu0 0.0
    %1653 = vmatpush1.xpose.msra.mxu0 0.0
    %1654 = vmatprep.subr.mxu0 0.0
    %1655 = vmatpush1.xpose.msra.mxu0 0.0
    %1656 = vmatprep.subr.mxu0 0.0
    %1657 = vmatpush1.xpose.msra.mxu0 0.0
    %1658 = vmatprep.subr.mxu0 0.0
    %1659 = vmatpush1.xpose.msra.mxu0 0.0
    %1660 = vmatprep.subr.mxu0 0.0
    %1661 = vmatpush1.xpose.msra.mxu0 0.0
    %1662 = vmatprep.subr.mxu0 0.0
    %1663 = vmatpush1.xpose.msra.mxu0 0.0
    %1664 = vmatprep.subr.mxu0 0.0
    %1665 = vmatpush1.xpose.msra.mxu0 0.0
    %1666 = vmatprep.mubr.f32.mxu0 0.0
    %1667 = vmatmul.mubr.f32.gmra.mrb[0].mxu0 %v1597
    %v1668 = vpop.f32.mrb[0].mxu0
    %v1669 = vadd.f32 0.0, %v1668
    %v1670 = vpop.f32.mrb[0].mxu0
    %1671 = vdwg.mxu0
    %v1672 = vsel %vm1063, %v1137, -inf
    %1673 = vmax.xlane.f32.xlu0 %v1672
    %v1674 = vpop.xlane.xlu0 %1673
    %v1675 = vsel %vm1063, %v1213, -inf
    %1676 = vmax.xlane.f32.xlu0 %v1675
    %v1677 = vpop.xlane.xlu0 %1676
    %v1678 = vsel %vm1063, %v1289, -inf
    %1679 = vmax.xlane.f32.xlu0 %v1678
    %v1680 = vpop.xlane.xlu0 %1679
    %v1681 = vsel %vm1063, %v1365, -inf
    %1682 = vmax.xlane.f32.xlu0 %v1681
    %v1683 = vpop.xlane.xlu0 %1682
    %v1684 = vsel %vm1063, %v1441, -inf
    %1685 = vmax.xlane.f32.xlu0 %v1684
    %v1686 = vpop.xlane.xlu0 %1685
    %v1687 = vsel %vm1063, %v1517, -inf
    %1688 = vmax.xlane.f32.xlu0 %v1687
    %v1689 = vpop.xlane.xlu0 %1688
    %v1690 = vsel %vm1063, %v1593, -inf
    %1691 = vmax.xlane.f32.xlu0 %v1690
    %v1692 = vpop.xlane.xlu0 %1691
    %v1693 = vsel %vm1063, %v1669, -inf
    %1694 = vmax.xlane.f32.xlu0 %v1693
    %v1695 = vpop.xlane.xlu0 %1694
    %v1696 = vsub.f32 %v1137, %v1674
    %v1697 = vsub.f32 %v1213, %v1677
    %v1698 = vsub.f32 %v1289, %v1680
    %v1699 = vsub.f32 %v1365, %v1683
    %v1700 = vsub.f32 %v1441, %v1686
    %v1701 = vsub.f32 %v1517, %v1689
    %v1702 = vsub.f32 %v1593, %v1692
    %v1703 = vsub.f32 %v1669, %v1695
    %v1704 = vmul.f32 %v1696, 1.442695
    %v1705 = vpow.pop %v1704
    %v1706 = vmul.f32 %v1697, 1.442695
    %v1707 = vpow.pop %v1706
    %v1708 = vmul.f32 %v1698, 1.442695
    %v1709 = vpow.pop %v1708
    %v1710 = vmul.f32 %v1699, 1.442695
    %v1711 = vpow.pop %v1710
    %v1712 = vmul.f32 %v1700, 1.442695
    %v1713 = vpow.pop %v1712
    %v1714 = vmul.f32 %v1701, 1.442695
    %v1715 = vpow.pop %v1714
    %v1716 = vmul.f32 %v1702, 1.442695
    %v1717 = vpow.pop %v1716
    %v1718 = vmul.f32 %v1703, 1.442695
    %v1719 = vpow.pop %v1718
    %v1720 = vsel %vm1063, %v1705, 0.0
    %1721 = vadd.xlane.f32.xlu0 %v1720
    %v1722 = vpop.xlane.xlu0 %1721
    %v1723 = vsel %vm1063, %v1707, 0.0
    %1724 = vadd.xlane.f32.xlu0 %v1723
    %v1725 = vpop.xlane.xlu0 %1724
    %v1726 = vsel %vm1063, %v1709, 0.0
    %1727 = vadd.xlane.f32.xlu0 %v1726
    %v1728 = vpop.xlane.xlu0 %1727
    %v1729 = vsel %vm1063, %v1711, 0.0
    %1730 = vadd.xlane.f32.xlu0 %v1729
    %v1731 = vpop.xlane.xlu0 %1730
    %v1732 = vsel %vm1063, %v1713, 0.0
    %1733 = vadd.xlane.f32.xlu0 %v1732
    %v1734 = vpop.xlane.xlu0 %1733
    %v1735 = vsel %vm1063, %v1715, 0.0
    %1736 = vadd.xlane.f32.xlu0 %v1735
    %v1737 = vpop.xlane.xlu0 %1736
    %v1738 = vsel %vm1063, %v1717, 0.0
    %1739 = vadd.xlane.f32.xlu0 %v1738
    %v1740 = vpop.xlane.xlu0 %1739
    %v1741 = vsel %vm1063, %v1719, 0.0
    %1742 = vadd.xlane.f32.xlu0 %v1741
    %v1743 = vpop.xlane.xlu0 %1742
    %v1744 = vrcp.pop %v1722
    %v1745 = vrcp.pop %v1725
    %v1746 = vrcp.pop %v1728
    %v1747 = vrcp.pop %v1731
    %v1748 = vrcp.pop %v1734
    %v1749 = vrcp.pop %v1737
    %v1750 = vrcp.pop %v1740
    %v1751 = vrcp.pop %v1743
    %v1752 = vmul.f32 %v1705, %v1744
    %v1753 = vmul.f32 %v1707, %v1745
    %v1754 = vmul.f32 %v1709, %v1746
    %v1755 = vmul.f32 %v1711, %v1747
    %v1756 = vmul.f32 %v1713, %v1748
    %v1757 = vmul.f32 %v1715, %v1749
    %v1758 = vmul.f32 %v1717, %v1750
    %v1759 = vmul.f32 %v1719, %v1751
    %v1761 = vsel %vm1063, %v1752, 0
    %1763 = vmatprep.subr.mxu0 0.0
    %1764 = vmatpush1.msra.mxu0 %v991
    %1765 = vmatprep.subr.mxu0 0.0
    %1766 = vmatpush1.msra.mxu0 0.0
    %1767 = vmatprep.subr.mxu0 0.0
    %1768 = vmatpush1.msra.mxu0 0.0
    %1769 = vmatprep.subr.mxu0 0.0
    %1770 = vmatpush1.msra.mxu0 0.0
    %1771 = vmatprep.subr.mxu0 0.0
    %1772 = vmatpush1.msra.mxu0 0.0
    %1773 = vmatprep.subr.mxu0 0.0
    %1774 = vmatpush1.msra.mxu0 0.0
    %1775 = vmatprep.subr.mxu0 0.0
    %1776 = vmatpush1.msra.mxu0 0.0
    %1777 = vmatprep.subr.mxu0 0.0
    %1778 = vmatpush1.msra.mxu0 0.0
    %1779 = vmatprep.subr.mxu0 0.0
    %1780 = vmatpush1.msra.mxu0 0.0
    %1781 = vmatprep.subr.mxu0 0.0
    %1782 = vmatpush1.msra.mxu0 0.0
    %1783 = vmatprep.subr.mxu0 0.0
    %1784 = vmatpush1.msra.mxu0 0.0
    %1785 = vmatprep.subr.mxu0 0.0
    %1786 = vmatpush1.msra.mxu0 0.0
    %1787 = vmatprep.subr.mxu0 0.0
    %1788 = vmatpush1.msra.mxu0 0.0
    %1789 = vmatprep.subr.mxu0 0.0
    %1790 = vmatpush1.msra.mxu0 0.0
    %1791 = vmatprep.subr.mxu0 0.0
    %1792 = vmatpush1.msra.mxu0 0.0
    %1793 = vmatprep.subr.mxu0 0.0
    %1794 = vmatpush1.msra.mxu0 0.0
    %1795 = vmatprep.subr.mxu0 0.0
    %1796 = vmatpush1.msra.mxu0 0.0
    %1797 = vmatprep.subr.mxu0 0.0
    %1798 = vmatpush1.msra.mxu0 0.0
    %1799 = vmatprep.subr.mxu0 0.0
    %1800 = vmatpush1.msra.mxu0 0.0
    %1801 = vmatprep.subr.mxu0 0.0
    %1802 = vmatpush1.msra.mxu0 0.0
    %1803 = vmatprep.subr.mxu0 0.0
    %1804 = vmatpush1.msra.mxu0 0.0
    %1805 = vmatprep.subr.mxu0 0.0
    %1806 = vmatpush1.msra.mxu0 0.0
    %1807 = vmatprep.subr.mxu0 0.0
    %1808 = vmatpush1.msra.mxu0 0.0
    %1809 = vmatprep.subr.mxu0 0.0
    %1810 = vmatpush1.msra.mxu0 0.0
    %1811 = vmatprep.subr.mxu0 0.0
    %1812 = vmatpush1.msra.mxu0 0.0
    %1813 = vmatprep.subr.mxu0 0.0
    %1814 = vmatpush1.msra.mxu0 0.0
    %1815 = vmatprep.subr.mxu0 0.0
    %1816 = vmatpush1.msra.mxu0 0.0
    %1817 = vmatprep.subr.mxu0 0.0
    %1818 = vmatpush1.msra.mxu0 0.0
    %1819 = vmatprep.subr.mxu0 0.0
    %1820 = vmatpush1.msra.mxu0 0.0
    %1821 = vmatprep.subr.mxu0 0.0
    %1822 = vmatpush1.msra.mxu0 0.0
    %1823 = vmatprep.subr.mxu0 0.0
    %1824 = vmatpush1.msra.mxu0 0.0
    %1825 = vmatprep.subr.mxu0 0.0
    %1826 = vmatpush1.msra.mxu0 0.0
    %1827 = vmatprep.mubr.f32.mxu0 0.0
    %1828 = vmatmul.mubr.f32.gmra.mrb[0].mxu0 %v1761
    %v1829 = vpop.f32.mrb[0].mxu0
    %v1830 = vadd.f32 0.0, %v1829
    %v1831 = vpop.f32.mrb[0].mxu0
    %1832 = vdwg.mxu0
    %v1834 = vsel %vm1063, %v1753, 0
    %1836 = vmatprep.subr.mxu0 0.0
    %1837 = vmatpush1.msra.mxu0 %v992
    %1838 = vmatprep.subr.mxu0 0.0
    %1839 = vmatpush1.msra.mxu0 0.0
    %1840 = vmatprep.subr.mxu0 0.0
    %1841 = vmatpush1.msra.mxu0 0.0
    %1842 = vmatprep.subr.mxu0 0.0
    %1843 = vmatpush1.msra.mxu0 0.0
    %1844 = vmatprep.subr.mxu0 0.0
    %1845 = vmatpush1.msra.mxu0 0.0
    %1846 = vmatprep.subr.mxu0 0.0
    %1847 = vmatpush1.msra.mxu0 0.0
    %1848 = vmatprep.subr.mxu0 0.0
    %1849 = vmatpush1.msra.mxu0 0.0
    %1850 = vmatprep.subr.mxu0 0.0
    %1851 = vmatpush1.msra.mxu0 0.0
    %1852 = vmatprep.subr.mxu0 0.0
    %1853 = vmatpush1.msra.mxu0 0.0
    %1854 = vmatprep.subr.mxu0 0.0
    %1855 = vmatpush1.msra.mxu0 0.0
    %1856 = vmatprep.subr.mxu0 0.0
    %1857 = vmatpush1.msra.mxu0 0.0
    %1858 = vmatprep.subr.mxu0 0.0
    %1859 = vmatpush1.msra.mxu0 0.0
    %1860 = vmatprep.subr.mxu0 0.0
    %1861 = vmatpush1.msra.mxu0 0.0
    %1862 = vmatprep.subr.mxu0 0.0
    %1863 = vmatpush1.msra.mxu0 0.0
    %1864 = vmatprep.subr.mxu0 0.0
    %1865 = vmatpush1.msra.mxu0 0.0
    %1866 = vmatprep.subr.mxu0 0.0
    %1867 = vmatpush1.msra.mxu0 0.0
    %1868 = vmatprep.subr.mxu0 0.0
    %1869 = vmatpush1.msra.mxu0 0.0
    %1870 = vmatprep.subr.mxu0 0.0
    %1871 = vmatpush1.msra.mxu0 0.0
    %1872 = vmatprep.subr.mxu0 0.0
    %1873 = vmatpush1.msra.mxu0 0.0
    %1874 = vmatprep.subr.mxu0 0.0
    %1875 = vmatpush1.msra.mxu0 0.0
    %1876 = vmatprep.subr.mxu0 0.0
    %1877 = vmatpush1.msra.mxu0 0.0
    %1878 = vmatprep.subr.mxu0 0.0
    %1879 = vmatpush1.msra.mxu0 0.0
    %1880 = vmatprep.subr.mxu0 0.0
    %1881 = vmatpush1.msra.mxu0 0.0
    %1882 = vmatprep.subr.mxu0 0.0
    %1883 = vmatpush1.msra.mxu0 0.0
    %1884 = vmatprep.subr.mxu0 0.0
    %1885 = vmatpush1.msra.mxu0 0.0
    %1886 = vmatprep.subr.mxu0 0.0
    %1887 = vmatpush1.msra.mxu0 0.0
    %1888 = vmatprep.subr.mxu0 0.0
    %1889 = vmatpush1.msra.mxu0 0.0
    %1890 = vmatprep.subr.mxu0 0.0
    %1891 = vmatpush1.msra.mxu0 0.0
    %1892 = vmatprep.subr.mxu0 0.0
    %1893 = vmatpush1.msra.mxu0 0.0
    %1894 = vmatprep.subr.mxu0 0.0
    %1895 = vmatpush1.msra.mxu0 0.0
    %1896 = vmatprep.subr.mxu0 0.0
    %1897 = vmatpush1.msra.mxu0 0.0
    %1898 = vmatprep.subr.mxu0 0.0
    %1899 = vmatpush1.msra.mxu0 0.0
    %1900 = vmatprep.mubr.f32.mxu0 0.0
    %1901 = vmatmul.mubr.f32.gmra.mrb[0].mxu0 %v1834
    %v1902 = vpop.f32.mrb[0].mxu0
    %v1903 = vadd.f32 0.0, %v1902
    %v1904 = vpop.f32.mrb[0].mxu0
    %1905 = vdwg.mxu0
    %v1907 = vsel %vm1063, %v1754, 0
    %1909 = vmatprep.subr.mxu0 0.0
    %1910 = vmatpush1.msra.mxu0 %v993
    %1911 = vmatprep.subr.mxu0 0.0
    %1912 = vmatpush1.msra.mxu0 0.0
    %1913 = vmatprep.subr.mxu0 0.0
    %1914 = vmatpush1.msra.mxu0 0.0
    %1915 = vmatprep.subr.mxu0 0.0
    %1916 = vmatpush1.msra.mxu0 0.0
    %1917 = vmatprep.subr.mxu0 0.0
    %1918 = vmatpush1.msra.mxu0 0.0
    %1919 = vmatprep.subr.mxu0 0.0
    %1920 = vmatpush1.msra.mxu0 0.0
    %1921 = vmatprep.subr.mxu0 0.0
    %1922 = vmatpush1.msra.mxu0 0.0
    %1923 = vmatprep.subr.mxu0 0.0
    %1924 = vmatpush1.msra.mxu0 0.0
    %1925 = vmatprep.subr.mxu0 0.0
    %1926 = vmatpush1.msra.mxu0 0.0
    %1927 = vmatprep.subr.mxu0 0.0
    %1928 = vmatpush1.msra.mxu0 0.0
    %1929 = vmatprep.subr.mxu0 0.0
    %1930 = vmatpush1.msra.mxu0 0.0
    %1931 = vmatprep.subr.mxu0 0.0
    %1932 = vmatpush1.msra.mxu0 0.0
    %1933 = vmatprep.subr.mxu0 0.0
    %1934 = vmatpush1.msra.mxu0 0.0
    %1935 = vmatprep.subr.mxu0 0.0
    %1936 = vmatpush1.msra.mxu0 0.0
    %1937 = vmatprep.subr.mxu0 0.0
    %1938 = vmatpush1.msra.mxu0 0.0
    %1939 = vmatprep.subr.mxu0 0.0
    %1940 = vmatpush1.msra.mxu0 0.0
    %1941 = vmatprep.subr.mxu0 0.0
    %1942 = vmatpush1.msra.mxu0 0.0
    %1943 = vmatprep.subr.mxu0 0.0
    %1944 = vmatpush1.msra.mxu0 0.0
    %1945 = vmatprep.subr.mxu0 0.0
    %1946 = vmatpush1.msra.mxu0 0.0
    %1947 = vmatprep.subr.mxu0 0.0
    %1948 = vmatpush1.msra.mxu0 0.0
    %1949 = vmatprep.subr.mxu0 0.0
    %1950 = vmatpush1.msra.mxu0 0.0
    %1951 = vmatprep.subr.mxu0 0.0
    %1952 = vmatpush1.msra.mxu0 0.0
    %1953 = vmatprep.subr.mxu0 0.0
    %1954 = vmatpush1.msra.mxu0 0.0
    %1955 = vmatprep.subr.mxu0 0.0
    %1956 = vmatpush1.msra.mxu0 0.0
    %1957 = vmatprep.subr.mxu0 0.0
    %1958 = vmatpush1.msra.mxu0 0.0
    %1959 = vmatprep.subr.mxu0 0.0
    %1960 = vmatpush1.msra.mxu0 0.0
    %1961 = vmatprep.subr.mxu0 0.0
    %1962 = vmatpush1.msra.mxu0 0.0
    %1963 = vmatprep.subr.mxu0 0.0
    %1964 = vmatpush1.msra.mxu0 0.0
    %1965 = vmatprep.subr.mxu0 0.0
    %1966 = vmatpush1.msra.mxu0 0.0
    %1967 = vmatprep.subr.mxu0 0.0
    %1968 = vmatpush1.msra.mxu0 0.0
    %1969 = vmatprep.subr.mxu0 0.0
    %1970 = vmatpush1.msra.mxu0 0.0
    %1971 = vmatprep.subr.mxu0 0.0
    %1972 = vmatpush1.msra.mxu0 0.0
    %1973 = vmatprep.mubr.f32.mxu0 0.0
    %1974 = vmatmul.mubr.f32.gmra.mrb[0].mxu0 %v1907
    %v1975 = vpop.f32.mrb[0].mxu0
    %v1976 = vadd.f32 0.0, %v1975
    %v1977 = vpop.f32.mrb[0].mxu0
    %1978 = vdwg.mxu0
    %v1980 = vsel %vm1063, %v1755, 0
    %1982 = vmatprep.subr.mxu0 0.0
    %1983 = vmatpush1.msra.mxu0 %v994
    %1984 = vmatprep.subr.mxu0 0.0
    %1985 = vmatpush1.msra.mxu0 0.0
    %1986 = vmatprep.subr.mxu0 0.0
    %1987 = vmatpush1.msra.mxu0 0.0
    %1988 = vmatprep.subr.mxu0 0.0
    %1989 = vmatpush1.msra.mxu0 0.0
    %1990 = vmatprep.subr.mxu0 0.0
    %1991 = vmatpush1.msra.mxu0 0.0
    %1992 = vmatprep.subr.mxu0 0.0
    %1993 = vmatpush1.msra.mxu0 0.0
    %1994 = vmatprep.subr.mxu0 0.0
    %1995 = vmatpush1.msra.mxu0 0.0
    %1996 = vmatprep.subr.mxu0 0.0
    %1997 = vmatpush1.msra.mxu0 0.0
    %1998 = vmatprep.subr.mxu0 0.0
    %1999 = vmatpush1.msra.mxu0 0.0
    %2000 = vmatprep.subr.mxu0 0.0
    %2001 = vmatpush1.msra.mxu0 0.0
    %2002 = vmatprep.subr.mxu0 0.0
    %2003 = vmatpush1.msra.mxu0 0.0
    %2004 = vmatprep.subr.mxu0 0.0
    %2005 = vmatpush1.msra.mxu0 0.0
    %2006 = vmatprep.subr.mxu0 0.0
    %2007 = vmatpush1.msra.mxu0 0.0
    %2008 = vmatprep.subr.mxu0 0.0
    %2009 = vmatpush1.msra.mxu0 0.0
    %2010 = vmatprep.subr.mxu0 0.0
    %2011 = vmatpush1.msra.mxu0 0.0
    %2012 = vmatprep.subr.mxu0 0.0
    %2013 = vmatpush1.msra.mxu0 0.0
    %2014 = vmatprep.subr.mxu0 0.0
    %2015 = vmatpush1.msra.mxu0 0.0
    %2016 = vmatprep.subr.mxu0 0.0
    %2017 = vmatpush1.msra.mxu0 0.0
    %2018 = vmatprep.subr.mxu0 0.0
    %2019 = vmatpush1.msra.mxu0 0.0
    %2020 = vmatprep.subr.mxu0 0.0
    %2021 = vmatpush1.msra.mxu0 0.0
    %2022 = vmatprep.subr.mxu0 0.0
    %2023 = vmatpush1.msra.mxu0 0.0
    %2024 = vmatprep.subr.mxu0 0.0
    %2025 = vmatpush1.msra.mxu0 0.0
    %2026 = vmatprep.subr.mxu0 0.0
    %2027 = vmatpush1.msra.mxu0 0.0
    %2028 = vmatprep.subr.mxu0 0.0
    %2029 = vmatpush1.msra.mxu0 0.0
    %2030 = vmatprep.subr.mxu0 0.0
    %2031 = vmatpush1.msra.mxu0 0.0
    %2032 = vmatprep.subr.mxu0 0.0
    %2033 = vmatpush1.msra.mxu0 0.0
    %2034 = vmatprep.subr.mxu0 0.0
    %2035 = vmatpush1.msra.mxu0 0.0
    %2036 = vmatprep.subr.mxu0 0.0
    %2037 = vmatpush1.msra.mxu0 0.0
    %2038 = vmatprep.subr.mxu0 0.0
    %2039 = vmatpush1.msra.mxu0 0.0
    %2040 = vmatprep.subr.mxu0 0.0
    %2041 = vmatpush1.msra.mxu0 0.0
    %2042 = vmatprep.subr.mxu0 0.0
    %2043 = vmatpush1.msra.mxu0 0.0
    %2044 = vmatprep.subr.mxu0 0.0
    %2045 = vmatpush1.msra.mxu0 0.0
    %2046 = vmatprep.mubr.f32.mxu0 0.0
    %2047 = vmatmul.mubr.f32.gmra.mrb[0].mxu0 %v1980
    %v2048 = vpop.f32.mrb[0].mxu0
    %v2049 = vadd.f32 0.0, %v2048
    %v2050 = vpop.f32.mrb[0].mxu0
    %2051 = vdwg.mxu0
    %v2053 = vsel %vm1063, %v1756, 0
    %2055 = vmatprep.subr.mxu0 0.0
    %2056 = vmatpush1.msra.mxu0 %v1059
    %2057 = vmatprep.subr.mxu0 0.0
    %2058 = vmatpush1.msra.mxu0 0.0
    %2059 = vmatprep.subr.mxu0 0.0
    %2060 = vmatpush1.msra.mxu0 0.0
    %2061 = vmatprep.subr.mxu0 0.0
    %2062 = vmatpush1.msra.mxu0 0.0
    %2063 = vmatprep.subr.mxu0 0.0
    %2064 = vmatpush1.msra.mxu0 0.0
    %2065 = vmatprep.subr.mxu0 0.0
    %2066 = vmatpush1.msra.mxu0 0.0
    %2067 = vmatprep.subr.mxu0 0.0
    %2068 = vmatpush1.msra.mxu0 0.0
    %2069 = vmatprep.subr.mxu0 0.0
    %2070 = vmatpush1.msra.mxu0 0.0
    %2071 = vmatprep.subr.mxu0 0.0
    %2072 = vmatpush1.msra.mxu0 0.0
    %2073 = vmatprep.subr.mxu0 0.0
    %2074 = vmatpush1.msra.mxu0 0.0
    %2075 = vmatprep.subr.mxu0 0.0
    %2076 = vmatpush1.msra.mxu0 0.0
    %2077 = vmatprep.subr.mxu0 0.0
    %2078 = vmatpush1.msra.mxu0 0.0
    %2079 = vmatprep.subr.mxu0 0.0
    %2080 = vmatpush1.msra.mxu0 0.0
    %2081 = vmatprep.subr.mxu0 0.0
    %2082 = vmatpush1.msra.mxu0 0.0
    %2083 = vmatprep.subr.mxu0 0.0
    %2084 = vmatpush1.msra.mxu0 0.0
    %2085 = vmatprep.subr.mxu0 0.0
    %2086 = vmatpush1.msra.mxu0 0.0
    %2087 = vmatprep.subr.mxu0 0.0
    %2088 = vmatpush1.msra.mxu0 0.0
    %2089 = vmatprep.subr.mxu0 0.0
    %2090 = vmatpush1.msra.mxu0 0.0
    %2091 = vmatprep.subr.mxu0 0.0
    %2092 = vmatpush1.msra.mxu0 0.0
    %2093 = vmatprep.subr.mxu0 0.0
    %2094 = vmatpush1.msra.mxu0 0.0
    %2095 = vmatprep.subr.mxu0 0.0
    %2096 = vmatpush1.msra.mxu0 0.0
    %2097 = vmatprep.subr.mxu0 0.0
    %2098 = vmatpush1.msra.mxu0 0.0
    %2099 = vmatprep.subr.mxu0 0.0
    %2100 = vmatpush1.msra.mxu0 0.0
    %2101 = vmatprep.subr.mxu0 0.0
    %2102 = vmatpush1.msra.mxu0 0.0
    %2103 = vmatprep.subr.mxu0 0.0
    %2104 = vmatpush1.msra.mxu0 0.0
    %2105 = vmatprep.subr.mxu0 0.0
    %2106 = vmatpush1.msra.mxu0 0.0
    %2107 = vmatprep.subr.mxu0 0.0
    %2108 = vmatpush1.msra.mxu0 0.0
    %2109 = vmatprep.subr.mxu0 0.0
    %2110 = vmatpush1.msra.mxu0 0.0
    %2111 = vmatprep.subr.mxu0 0.0
    %2112 = vmatpush1.msra.mxu0 0.0
    %2113 = vmatprep.subr.mxu0 0.0
    %2114 = vmatpush1.msra.mxu0 0.0
    %2115 = vmatprep.subr.mxu0 0.0
    %2116 = vmatpush1.msra.mxu0 0.0
    %2117 = vmatprep.subr.mxu0 0.0
    %2118 = vmatpush1.msra.mxu0 0.0
    %2119 = vmatprep.mubr.f32.mxu0 0.0
    %2120 = vmatmul.mubr.f32.gmra.mrb[0].mxu0 %v2053
    %v2121 = vpop.f32.mrb[0].mxu0
    %v2122 = vadd.f32 0.0, %v2121
    %v2123 = vpop.f32.mrb[0].mxu0
    %2124 = vdwg.mxu0
    %v2126 = vsel %vm1063, %v1757, 0
    %2128 = vmatprep.subr.mxu0 0.0
    %2129 = vmatpush1.msra.mxu0 %v1060
    %2130 = vmatprep.subr.mxu0 0.0
    %2131 = vmatpush1.msra.mxu0 0.0
    %2132 = vmatprep.subr.mxu0 0.0
    %2133 = vmatpush1.msra.mxu0 0.0
    %2134 = vmatprep.subr.mxu0 0.0
    %2135 = vmatpush1.msra.mxu0 0.0
    %2136 = vmatprep.subr.mxu0 0.0
    %2137 = vmatpush1.msra.mxu0 0.0
    %2138 = vmatprep.subr.mxu0 0.0
    %2139 = vmatpush1.msra.mxu0 0.0
    %2140 = vmatprep.subr.mxu0 0.0
    %2141 = vmatpush1.msra.mxu0 0.0
    %2142 = vmatprep.subr.mxu0 0.0
    %2143 = vmatpush1.msra.mxu0 0.0
    %2144 = vmatprep.subr.mxu0 0.0
    %2145 = vmatpush1.msra.mxu0 0.0
    %2146 = vmatprep.subr.mxu0 0.0
    %2147 = vmatpush1.msra.mxu0 0.0
    %2148 = vmatprep.subr.mxu0 0.0
    %2149 = vmatpush1.msra.mxu0 0.0
    %2150 = vmatprep.subr.mxu0 0.0
    %2151 = vmatpush1.msra.mxu0 0.0
    %2152 = vmatprep.subr.mxu0 0.0
    %2153 = vmatpush1.msra.mxu0 0.0
    %2154 = vmatprep.subr.mxu0 0.0
    %2155 = vmatpush1.msra.mxu0 0.0
    %2156 = vmatprep.subr.mxu0 0.0
    %2157 = vmatpush1.msra.mxu0 0.0
    %2158 = vmatprep.subr.mxu0 0.0
    %2159 = vmatpush1.msra.mxu0 0.0
    %2160 = vmatprep.subr.mxu0 0.0
    %2161 = vmatpush1.msra.mxu0 0.0
    %2162 = vmatprep.subr.mxu0 0.0
    %2163 = vmatpush1.msra.mxu0 0.0
    %2164 = vmatprep.subr.mxu0 0.0
    %2165 = vmatpush1.msra.mxu0 0.0
    %2166 = vmatprep.subr.mxu0 0.0
    %2167 = vmatpush1.msra.mxu0 0.0
    %2168 = vmatprep.subr.mxu0 0.0
    %2169 = vmatpush1.msra.mxu0 0.0
    %2170 = vmatprep.subr.mxu0 0.0
    %2171 = vmatpush1.msra.mxu0 0.0
    %2172 = vmatprep.subr.mxu0 0.0
    %2173 = vmatpush1.msra.mxu0 0.0
    %2174 = vmatprep.subr.mxu0 0.0
    %2175 = vmatpush1.msra.mxu0 0.0
    %2176 = vmatprep.subr.mxu0 0.0
    %2177 = vmatpush1.msra.mxu0 0.0
    %2178 = vmatprep.subr.mxu0 0.0
    %2179 = vmatpush1.msra.mxu0 0.0
    %2180 = vmatprep.subr.mxu0 0.0
    %2181 = vmatpush1.msra.mxu0 0.0
    %2182 = vmatprep.subr.mxu0 0.0
    %2183 = vmatpush1.msra.mxu0 0.0
    %2184 = vmatprep.subr.mxu0 0.0
    %2185 = vmatpush1.msra.mxu0 0.0
    %2186 = vmatprep.subr.mxu0 0.0
    %2187 = vmatpush1.msra.mxu0 0.0
    %2188 = vmatprep.subr.mxu0 0.0
    %2189 = vmatpush1.msra.mxu0 0.0
    %2190 = vmatprep.subr.mxu0 0.0
    %2191 = vmatpush1.msra.mxu0 0.0
    %2192 = vmatprep.mubr.f32.mxu0 0.0
    %2193 = vmatmul.mubr.f32.gmra.mrb[0].mxu0 %v2126
    %v2194 = vpop.f32.mrb[0].mxu0
    %v2195 = vadd.f32 0.0, %v2194
    %v2196 = vpop.f32.mrb[0].mxu0
    %2197 = vdwg.mxu0
    %v2199 = vsel %vm1063, %v1758, 0
    %2201 = vmatprep.subr.mxu0 0.0
    %2202 = vmatpush1.msra.mxu0 %v1061
    %2203 = vmatprep.subr.mxu0 0.0
    %2204 = vmatpush1.msra.mxu0 0.0
    %2205 = vmatprep.subr.mxu0 0.0
    %2206 = vmatpush1.msra.mxu0 0.0
    %2207 = vmatprep.subr.mxu0 0.0
    %2208 = vmatpush1.msra.mxu0 0.0
    %2209 = vmatprep.subr.mxu0 0.0
    %2210 = vmatpush1.msra.mxu0 0.0
    %2211 = vmatprep.subr.mxu0 0.0
    %2212 = vmatpush1.msra.mxu0 0.0
    %2213 = vmatprep.subr.mxu0 0.0
    %2214 = vmatpush1.msra.mxu0 0.0
    %2215 = vmatprep.subr.mxu0 0.0
    %2216 = vmatpush1.msra.mxu0 0.0
    %2217 = vmatprep.subr.mxu0 0.0
    %2218 = vmatpush1.msra.mxu0 0.0
    %2219 = vmatprep.subr.mxu0 0.0
    %2220 = vmatpush1.msra.mxu0 0.0
    %2221 = vmatprep.subr.mxu0 0.0
    %2222 = vmatpush1.msra.mxu0 0.0
    %2223 = vmatprep.subr.mxu0 0.0
    %2224 = vmatpush1.msra.mxu0 0.0
    %2225 = vmatprep.subr.mxu0 0.0
    %2226 = vmatpush1.msra.mxu0 0.0
    %2227 = vmatprep.subr.mxu0 0.0
    %2228 = vmatpush1.msra.mxu0 0.0
    %2229 = vmatprep.subr.mxu0 0.0
    %2230 = vmatpush1.msra.mxu0 0.0
    %2231 = vmatprep.subr.mxu0 0.0
    %2232 = vmatpush1.msra.mxu0 0.0
    %2233 = vmatprep.subr.mxu0 0.0
    %2234 = vmatpush1.msra.mxu0 0.0
    %2235 = vmatprep.subr.mxu0 0.0
    %2236 = vmatpush1.msra.mxu0 0.0
    %2237 = vmatprep.subr.mxu0 0.0
    %2238 = vmatpush1.msra.mxu0 0.0
    %2239 = vmatprep.subr.mxu0 0.0
    %2240 = vmatpush1.msra.mxu0 0.0
    %2241 = vmatprep.subr.mxu0 0.0
    %2242 = vmatpush1.msra.mxu0 0.0
    %2243 = vmatprep.subr.mxu0 0.0
    %2244 = vmatpush1.msra.mxu0 0.0
    %2245 = vmatprep.subr.mxu0 0.0
    %2246 = vmatpush1.msra.mxu0 0.0
    %2247 = vmatprep.subr.mxu0 0.0
    %2248 = vmatpush1.msra.mxu0 0.0
    %2249 = vmatprep.subr.mxu0 0.0
    %2250 = vmatpush1.msra.mxu0 0.0
    %2251 = vmatprep.subr.mxu0 0.0
    %2252 = vmatpush1.msra.mxu0 0.0
    %2253 = vmatprep.subr.mxu0 0.0
    %2254 = vmatpush1.msra.mxu0 0.0
    %2255 = vmatprep.subr.mxu0 0.0
    %2256 = vmatpush1.msra.mxu0 0.0
    %2257 = vmatprep.subr.mxu0 0.0
    %2258 = vmatpush1.msra.mxu0 0.0
    %2259 = vmatprep.subr.mxu0 0.0
    %2260 = vmatpush1.msra.mxu0 0.0
    %2261 = vmatprep.subr.mxu0 0.0
    %2262 = vmatpush1.msra.mxu0 0.0
    %2263 = vmatprep.subr.mxu0 0.0
    %2264 = vmatpush1.msra.mxu0 0.0
    %2265 = vmatprep.mubr.f32.mxu0 0.0
    %2266 = vmatmul.mubr.f32.gmra.mrb[0].mxu0 %v2199
    %v2267 = vpop.f32.mrb[0].mxu0
    %v2268 = vadd.f32 0.0, %v2267
    %v2269 = vpop.f32.mrb[0].mxu0
    %2270 = vdwg.mxu0
    %v2272 = vsel %vm1063, %v1759, 0
    %2274 = vmatprep.subr.mxu0 0.0
    %2275 = vmatpush1.msra.mxu0 %v1062
    %2276 = vmatprep.subr.mxu0 0.0
    %2277 = vmatpush1.msra.mxu0 0.0
    %2278 = vmatprep.subr.mxu0 0.0
    %2279 = vmatpush1.msra.mxu0 0.0
    %2280 = vmatprep.subr.mxu0 0.0
    %2281 = vmatpush1.msra.mxu0 0.0
    %2282 = vmatprep.subr.mxu0 0.0
    %2283 = vmatpush1.msra.mxu0 0.0
    %2284 = vmatprep.subr.mxu0 0.0
    %2285 = vmatpush1.msra.mxu0 0.0
    %2286 = vmatprep.subr.mxu0 0.0
    %2287 = vmatpush1.msra.mxu0 0.0
    %2288 = vmatprep.subr.mxu0 0.0
    %2289 = vmatpush1.msra.mxu0 0.0
    %2290 = vmatprep.subr.mxu0 0.0
    %2291 = vmatpush1.msra.mxu0 0.0
    %2292 = vmatprep.subr.mxu0 0.0
    %2293 = vmatpush1.msra.mxu0 0.0
    %2294 = vmatprep.subr.mxu0 0.0
    %2295 = vmatpush1.msra.mxu0 0.0
    %2296 = vmatprep.subr.mxu0 0.0
    %2297 = vmatpush1.msra.mxu0 0.0
    %2298 = vmatprep.subr.mxu0 0.0
    %2299 = vmatpush1.msra.mxu0 0.0
    %2300 = vmatprep.subr.mxu0 0.0
    %2301 = vmatpush1.msra.mxu0 0.0
    %2302 = vmatprep.subr.mxu0 0.0
    %2303 = vmatpush1.msra.mxu0 0.0
    %2304 = vmatprep.subr.mxu0 0.0
    %2305 = vmatpush1.msra.mxu0 0.0
    %2306 = vmatprep.subr.mxu0 0.0
    %2307 = vmatpush1.msra.mxu0 0.0
    %2308 = vmatprep.subr.mxu0 0.0
    %2309 = vmatpush1.msra.mxu0 0.0
    %2310 = vmatprep.subr.mxu0 0.0
    %2311 = vmatpush1.msra.mxu0 0.0
    %2312 = vmatprep.subr.mxu0 0.0
    %2313 = vmatpush1.msra.mxu0 0.0
    %2314 = vmatprep.subr.mxu0 0.0
    %2315 = vmatpush1.msra.mxu0 0.0
    %2316 = vmatprep.subr.mxu0 0.0
    %2317 = vmatpush1.msra.mxu0 0.0
    %2318 = vmatprep.subr.mxu0 0.0
    %2319 = vmatpush1.msra.mxu0 0.0
    %2320 = vmatprep.subr.mxu0 0.0
    %2321 = vmatpush1.msra.mxu0 0.0
    %2322 = vmatprep.subr.mxu0 0.0
    %2323 = vmatpush1.msra.mxu0 0.0
    %2324 = vmatprep.subr.mxu0 0.0
    %2325 = vmatpush1.msra.mxu0 0.0
    %2326 = vmatprep.subr.mxu0 0.0
    %2327 = vmatpush1.msra.mxu0 0.0
    %2328 = vmatprep.subr.mxu0 0.0
    %2329 = vmatpush1.msra.mxu0 0.0
    %2330 = vmatprep.subr.mxu0 0.0
    %2331 = vmatpush1.msra.mxu0 0.0
    %2332 = vmatprep.subr.mxu0 0.0
    %2333 = vmatpush1.msra.mxu0 0.0
    %2334 = vmatprep.subr.mxu0 0.0
    %2335 = vmatpush1.msra.mxu0 0.0
    %2336 = vmatprep.subr.mxu0 0.0
    %2337 = vmatpush1.msra.mxu0 0.0
    %2338 = vmatprep.mubr.f32.mxu0 0.0
    %2339 = vmatmul.mubr.f32.gmra.mrb[0].mxu0 %v2272
    %v2340 = vpop.f32.mrb[0].mxu0
    %v2341 = vadd.f32 0.0, %v2340
    %v2342 = vpop.f32.mrb[0].mxu0
    %2343 = vdwg.mxu0
    %v2344 = vcombine.low %v1830, %v1976
    %v2345 = vcombine.high %v1830, %v1976
    %v2347 = vunpack.c.l.s4 1983009808
    %v2348 = vunpack.c.0.s8 %v2347
    %v2349 = vlaneseq
    %v2350 = vshrl.u32 %v2349, 7
    %v2351 = vsub.s32 %v2348, %v2350
    %v2352 = vrot.slane %v2344, %v2351
    %v2354 = vunpack.c.l.s4 1983009808
    %v2355 = vunpack.c.0.s8 %v2354
    %v2356 = vlaneseq
    %v2357 = vshrl.u32 %v2356, 7
    %v2358 = vsub.s32 %v2355, %v2357
    %v2359 = vrot.slane %v2345, %v2358
    %v2360 = vcombine.low %v1903, %v2049
    %v2361 = vcombine.high %v1903, %v2049
    %v2363 = vunpack.c.l.s4 1983009808
    %v2364 = vunpack.c.0.s8 %v2363
    %v2365 = vlaneseq
    %v2366 = vshrl.u32 %v2365, 7
    %v2367 = vsub.s32 %v2364, %v2366
    %v2368 = vrot.slane %v2360, %v2367
    %v2370 = vunpack.c.l.s4 1983009808
    %v2371 = vunpack.c.0.s8 %v2370
    %v2372 = vlaneseq
    %v2373 = vshrl.u32 %v2372, 7
    %v2374 = vsub.s32 %v2371, %v2373
    %v2375 = vrot.slane %v2361, %v2374
    %v2376 = vcombine.low %v2352, %v2368
    %v2377 = vcombine.high %v2352, %v2368
    %v2379 = vunpack.c.l.s4 1934713408
    %v2380 = vunpack.c.0.s8 %v2379
    %v2381 = vlaneseq
    %v2382 = vshrl.u32 %v2381, 7
    %v2383 = vsub.s32 %v2380, %v2382
    %v2384 = vrot.slane %v2376, %v2383
    %v2386 = vunpack.c.l.s4 1934713408
    %v2387 = vunpack.c.0.s8 %v2386
    %v2388 = vlaneseq
    %v2389 = vshrl.u32 %v2388, 7
    %v2390 = vsub.s32 %v2387, %v2389
    %v2391 = vrot.slane %v2377, %v2390
    %v2392 = vcombine.low %v2359, %v2375
    %v2393 = vcombine.high %v2359, %v2375
    %v2395 = vunpack.c.l.s4 1934713408
    %v2396 = vunpack.c.0.s8 %v2395
    %v2397 = vlaneseq
    %v2398 = vshrl.u32 %v2397, 7
    %v2399 = vsub.s32 %v2396, %v2398
    %v2400 = vrot.slane %v2392, %v2399
    %v2402 = vunpack.c.l.s4 1934713408
    %v2403 = vunpack.c.0.s8 %v2402
    %v2404 = vlaneseq
    %v2405 = vshrl.u32 %v2404, 7
    %v2406 = vsub.s32 %v2403, %v2405
    %v2407 = vrot.slane %v2393, %v2406
    %v2408 = vcombine.high %v2384, 0.0
    %v2409 = vcombine.high %v2391, 0.0
    %v2410 = vcombine.high %v2400, 0.0
    %v2411 = vcombine.high %v2407, 0.0
    %v2412 = vcombine.low %v2122, %v2268
    %v2413 = vcombine.high %v2122, %v2268
    %v2415 = vunpack.c.l.s4 1983009808
    %v2416 = vunpack.c.0.s8 %v2415
    %v2417 = vlaneseq
    %v2418 = vshrl.u32 %v2417, 7
    %v2419 = vsub.s32 %v2416, %v2418
    %v2420 = vrot.slane %v2412, %v2419
    %v2422 = vunpack.c.l.s4 1983009808
    %v2423 = vunpack.c.0.s8 %v2422
    %v2424 = vlaneseq
    %v2425 = vshrl.u32 %v2424, 7
    %v2426 = vsub.s32 %v2423, %v2425
    %v2427 = vrot.slane %v2413, %v2426
    %v2428 = vcombine.low %v2195, %v2341
    %v2429 = vcombine.high %v2195, %v2341
    %v2431 = vunpack.c.l.s4 1983009808
    %v2432 = vunpack.c.0.s8 %v2431
    %v2433 = vlaneseq
    %v2434 = vshrl.u32 %v2433, 7
    %v2435 = vsub.s32 %v2432, %v2434
    %v2436 = vrot.slane %v2428, %v2435
    %v2438 = vunpack.c.l.s4 1983009808
    %v2439 = vunpack.c.0.s8 %v2438
    %v2440 = vlaneseq
    %v2441 = vshrl.u32 %v2440, 7
    %v2442 = vsub.s32 %v2439, %v2441
    %v2443 = vrot.slane %v2429, %v2442
    %v2444 = vcombine.low %v2420, %v2436
    %v2445 = vcombine.high %v2420, %v2436
    %v2447 = vunpack.c.l.s4 1934713408
    %v2448 = vunpack.c.0.s8 %v2447
    %v2449 = vlaneseq
    %v2450 = vshrl.u32 %v2449, 7
    %v2451 = vsub.s32 %v2448, %v2450
    %v2452 = vrot.slane %v2444, %v2451
    %v2454 = vunpack.c.l.s4 1934713408
    %v2455 = vunpack.c.0.s8 %v2454
    %v2456 = vlaneseq
    %v2457 = vshrl.u32 %v2456, 7
    %v2458 = vsub.s32 %v2455, %v2457
    %v2459 = vrot.slane %v2445, %v2458
    %v2460 = vcombine.low %v2427, %v2443
    %v2461 = vcombine.high %v2427, %v2443
    %v2463 = vunpack.c.l.s4 1934713408
    %v2464 = vunpack.c.0.s8 %v2463
    %v2465 = vlaneseq
    %v2466 = vshrl.u32 %v2465, 7
    %v2467 = vsub.s32 %v2464, %v2466
    %v2468 = vrot.slane %v2460, %v2467
    %v2470 = vunpack.c.l.s4 1934713408
    %v2471 = vunpack.c.0.s8 %v2470
    %v2472 = vlaneseq
    %v2473 = vshrl.u32 %v2472, 7
    %v2474 = vsub.s32 %v2471, %v2473
    %v2475 = vrot.slane %v2461, %v2474
    %v2476 = vcombine.high %v2452, 0.0
    %v2477 = vcombine.high %v2459, 0.0
    %v2478 = vcombine.high %v2468, 0.0
    %v2479 = vcombine.high %v2475, 0.0
    %v2480 = vcombine.low %v2384, %v2391
    %v2482 = vunpack.c.l.s4 1983009808
    %v2483 = vunpack.c.0.s8 %v2482
    %v2484 = vlaneseq
    %v2485 = vshrl.u32 %v2484, 7
    %v2486 = vsub.s32 %v2483, %v2485
    %v2487 = vrot.slane %v2480, %v2486
    %v2488 = vcombine.low %v2408, %v2409
    %v2490 = vunpack.c.l.s4 1983009808
    %v2491 = vunpack.c.0.s8 %v2490
    %v2492 = vlaneseq
    %v2493 = vshrl.u32 %v2492, 7
    %v2494 = vsub.s32 %v2491, %v2493
    %v2495 = vrot.slane %v2488, %v2494
    %v2496 = vcombine.low %v2400, %v2407
    %v2498 = vunpack.c.l.s4 1983009808
    %v2499 = vunpack.c.0.s8 %v2498
    %v2500 = vlaneseq
    %v2501 = vshrl.u32 %v2500, 7
    %v2502 = vsub.s32 %v2499, %v2501
    %v2503 = vrot.slane %v2496, %v2502
    %v2504 = vcombine.low %v2410, %v2411
    %v2506 = vunpack.c.l.s4 1983009808
    %v2507 = vunpack.c.0.s8 %v2506
    %v2508 = vlaneseq
    %v2509 = vshrl.u32 %v2508, 7
    %v2510 = vsub.s32 %v2507, %v2509
    %v2511 = vrot.slane %v2504, %v2510
    %v2512 = vcombine.low %v2487, %v2495
    %v2513 = vcombine.high %v2487, %v2495
    %v2515 = vunpack.c.l.s4 1934713408
    %v2516 = vunpack.c.0.s8 %v2515
    %v2517 = vlaneseq
    %v2518 = vshrl.u32 %v2517, 7
    %v2519 = vsub.s32 %v2516, %v2518
    %v2520 = vrot.slane %v2512, %v2519
    %v2522 = vunpack.c.l.s4 1934713408
    %v2523 = vunpack.c.0.s8 %v2522
    %v2524 = vlaneseq
    %v2525 = vshrl.u32 %v2524, 7
    %v2526 = vsub.s32 %v2523, %v2525
    %v2527 = vrot.slane %v2513, %v2526
    %v2528 = vcombine.low %v2503, %v2511
    %v2529 = vcombine.high %v2503, %v2511
    %v2531 = vunpack.c.l.s4 1934713408
    %v2532 = vunpack.c.0.s8 %v2531
    %v2533 = vlaneseq
    %v2534 = vshrl.u32 %v2533, 7
    %v2535 = vsub.s32 %v2532, %v2534
    %v2536 = vrot.slane %v2528, %v2535
    %v2538 = vunpack.c.l.s4 1934713408
    %v2539 = vunpack.c.0.s8 %v2538
    %v2540 = vlaneseq
    %v2541 = vshrl.u32 %v2540, 7
    %v2542 = vsub.s32 %v2539, %v2541
    %v2543 = vrot.slane %v2529, %v2542
    %v2544 = vcombine.low %v2520, %v2536
    %v2545 = vcombine.high %v2520, %v2536
    %v2546 = vcombine.low %v2527, %v2543
    %v2547 = vcombine.high %v2527, %v2543
    %v2548 = vcombine.low %v2452, %v2459
    %v2550 = vunpack.c.l.s4 1983009808
    %v2551 = vunpack.c.0.s8 %v2550
    %v2552 = vlaneseq
    %v2553 = vshrl.u32 %v2552, 7
    %v2554 = vsub.s32 %v2551, %v2553
    %v2555 = vrot.slane %v2548, %v2554
    %v2556 = vcombine.low %v2476, %v2477
    %v2558 = vunpack.c.l.s4 1983009808
    %v2559 = vunpack.c.0.s8 %v2558
    %v2560 = vlaneseq
    %v2561 = vshrl.u32 %v2560, 7
    %v2562 = vsub.s32 %v2559, %v2561
    %v2563 = vrot.slane %v2556, %v2562
    %v2564 = vcombine.low %v2468, %v2475
    %v2566 = vunpack.c.l.s4 1983009808
    %v2567 = vunpack.c.0.s8 %v2566
    %v2568 = vlaneseq
    %v2569 = vshrl.u32 %v2568, 7
    %v2570 = vsub.s32 %v2567, %v2569
    %v2571 = vrot.slane %v2564, %v2570
    %v2572 = vcombine.low %v2478, %v2479
    %v2574 = vunpack.c.l.s4 1983009808
    %v2575 = vunpack.c.0.s8 %v2574
    %v2576 = vlaneseq
    %v2577 = vshrl.u32 %v2576, 7
    %v2578 = vsub.s32 %v2575, %v2577
    %v2579 = vrot.slane %v2572, %v2578
    %v2580 = vcombine.low %v2555, %v2563
    %v2581 = vcombine.high %v2555, %v2563
    %v2583 = vunpack.c.l.s4 1934713408
    %v2584 = vunpack.c.0.s8 %v2583
    %v2585 = vlaneseq
    %v2586 = vshrl.u32 %v2585, 7
    %v2587 = vsub.s32 %v2584, %v2586
    %v2588 = vrot.slane %v2580, %v2587
    %v2590 = vunpack.c.l.s4 1934713408
    %v2591 = vunpack.c.0.s8 %v2590
    %v2592 = vlaneseq
    %v2593 = vshrl.u32 %v2592, 7
    %v2594 = vsub.s32 %v2591, %v2593
    %v2595 = vrot.slane %v2581, %v2594
    %v2596 = vcombine.low %v2571, %v2579
    %v2597 = vcombine.high %v2571, %v2579
    %v2599 = vunpack.c.l.s4 1934713408
    %v2600 = vunpack.c.0.s8 %v2599
    %v2601 = vlaneseq
    %v2602 = vshrl.u32 %v2601, 7
    %v2603 = vsub.s32 %v2600, %v2602
    %v2604 = vrot.slane %v2596, %v2603
    %v2606 = vunpack.c.l.s4 1934713408
    %v2607 = vunpack.c.0.s8 %v2606
    %v2608 = vlaneseq
    %v2609 = vshrl.u32 %v2608, 7
    %v2610 = vsub.s32 %v2607, %v2609
    %v2611 = vrot.slane %v2597, %v2610
    %v2612 = vcombine.low %v2588, %v2604
    %v2613 = vcombine.high %v2588, %v2604
    %v2614 = vcombine.low %v2595, %v2611
    %v2615 = vcombine.high %v2595, %v2611
    %2618 = vrot.lane.b32.xlu0 %v2545, 8
    %v2619 = vpop.permute.xlu0 %2618
    %2620 = vrot.lane.b32.xlu0 %v2613, 8
    %v2621 = vpop.permute.xlu0 %2620
    %2626 = vrot.lane.b32.xlu0 %v2546, 16
    %v2627 = vpop.permute.xlu0 %2626
    %2628 = vrot.lane.b32.xlu0 %v2614, 16
    %v2629 = vpop.permute.xlu0 %2628
    %2634 = vrot.lane.b32.xlu0 %v2547, 24
    %v2635 = vpop.permute.xlu0 %2634
    %2636 = vrot.lane.b32.xlu0 %v2615, 24
    %v2637 = vpop.permute.xlu0 %2636
    %v2640 = vsel %vm1063, %v2544, %v2619
    %v2641 = vsel %vm1063, %v2612, %v2621
    %vm2642 = vcmask 130048
    %v2643 = vsel %vm2642, %v2640, %v2627
    %v2644 = vsel %vm2642, %v2641, %v2629
    %vm2645 = vcmask 195584
    %v2646 = vsel %vm2645, %v2643, %v2635
    %v2647 = vsel %vm2645, %v2644, %v2637
    %v2648 = vld [vmem:[#allocation7] sm:$0xff]
    %v2649 = vld [vmem:[#allocation7 + $0x8] sm:$0xff]
    %v2650 = vld [vmem:[#allocation7 + $0x10] sm:$0xff]
    %v2651 = vld [vmem:[#allocation7 + $0x18] sm:$0xff]
    %v2652 = vld [vmem:[%s4] sm:$0x1]
    %v2654 = vlaneseq
    %v2655 = vshrl.u32 %v2654, 7
    %v2656 = vsub.s32 0, %v2655
    %v2657 = vrot.slane %v2652, %v2656
    %v2660 = vsel %vm81, %v2646, 0
    %v2663 = vsel %vm81, %v2647, 0
    %2665 = vmatprep.subr.mxu0 0.0
    %2666 = vmatpush1.msra.mxu0 %v2648
    %2667 = vmatprep.subr.mxu0 0.0
    %2668 = vmatpush1.msra.mxu0 %v2649
    %2669 = vmatprep.subr.mxu0 0.0
    %2670 = vmatpush1.msra.mxu0 %v2650
    %2671 = vmatprep.subr.mxu0 0.0
    %2672 = vmatpush1.msra.mxu0 %v2651
    %2673 = vmatprep.subr.mxu0 0.0
    %2674 = vmatpush1.msra.mxu0 0.0
    %2675 = vmatprep.subr.mxu0 0.0
    %2676 = vmatpush1.msra.mxu0 0.0
    %2677 = vmatprep.subr.mxu0 0.0
    %2678 = vmatpush1.msra.mxu0 0.0
    %2679 = vmatprep.subr.mxu0 0.0
    %2680 = vmatpush1.msra.mxu0 0.0
    %2681 = vmatprep.subr.mxu0 0.0
    %2682 = vmatpush1.msra.mxu0 0.0
    %2683 = vmatprep.subr.mxu0 0.0
    %2684 = vmatpush1.msra.mxu0 0.0
    %2685 = vmatprep.subr.mxu0 0.0
    %2686 = vmatpush1.msra.mxu0 0.0
    %2687 = vmatprep.subr.mxu0 0.0
    %2688 = vmatpush1.msra.mxu0 0.0
    %2689 = vmatprep.subr.mxu0 0.0
    %2690 = vmatpush1.msra.mxu0 0.0
    %2691 = vmatprep.subr.mxu0 0.0
    %2692 = vmatpush1.msra.mxu0 0.0
    %2693 = vmatprep.subr.mxu0 0.0
    %2694 = vmatpush1.msra.mxu0 0.0
    %2695 = vmatprep.subr.mxu0 0.0
    %2696 = vmatpush1.msra.mxu0 0.0
    %2697 = vmatprep.subr.mxu0 0.0
    %2698 = vmatpush1.msra.mxu0 0.0
    %2699 = vmatprep.subr.mxu0 0.0
    %2700 = vmatpush1.msra.mxu0 0.0
    %2701 = vmatprep.subr.mxu0 0.0
    %2702 = vmatpush1.msra.mxu0 0.0
    %2703 = vmatprep.subr.mxu0 0.0
    %2704 = vmatpush1.msra.mxu0 0.0
    %2705 = vmatprep.subr.mxu0 0.0
    %2706 = vmatpush1.msra.mxu0 0.0
    %2707 = vmatprep.subr.mxu0 0.0
    %2708 = vmatpush1.msra.mxu0 0.0
    %2709 = vmatprep.subr.mxu0 0.0
    %2710 = vmatpush1.msra.mxu0 0.0
    %2711 = vmatprep.subr.mxu0 0.0
    %2712 = vmatpush1.msra.mxu0 0.0
    %2713 = vmatprep.subr.mxu0 0.0
    %2714 = vmatpush1.msra.mxu0 0.0
    %2715 = vmatprep.subr.mxu0 0.0
    %2716 = vmatpush1.msra.mxu0 0.0
    %2717 = vmatprep.subr.mxu0 0.0
    %2718 = vmatpush1.msra.mxu0 0.0
    %2719 = vmatprep.subr.mxu0 0.0
    %2720 = vmatpush1.msra.mxu0 0.0
    %2721 = vmatprep.subr.mxu0 0.0
    %2722 = vmatpush1.msra.mxu0 0.0
    %2723 = vmatprep.subr.mxu0 0.0
    %2724 = vmatpush1.msra.mxu0 0.0
    %2725 = vmatprep.subr.mxu0 0.0
    %2726 = vmatpush1.msra.mxu0 0.0
    %2727 = vmatprep.subr.mxu0 0.0
    %2728 = vmatpush1.msra.mxu0 0.0
    %2729 = vmatprep.mubr.f32.mxu0 0.0
    %2730 = vmatmul.mubr.f32.gmra.mrb[0].mxu0 %v2660
    %v2731 = vpop.f32.mrb[0].mxu0
    %v2732 = vadd.f32 %v2657, %v2731
    %v2733 = vpop.f32.mrb[0].mxu0
    %2734 = vmatprep.mubr.f32.mxu0 0.0
    %2735 = vmatmul.mubr.f32.gmra.mrb[0].mxu0 %v2663
    %v2736 = vpop.f32.mrb[0].mxu0
    %v2737 = vadd.f32 %v2657, %v2736
    %v2738 = vpop.f32.mrb[0].mxu0
    %2739 = vdwg.mxu0
    %v2740 = vadd.f32 %v2732, %v68
    %v2741 = vadd.f32 %v2737, %v69
    %v2742 = vsel %vm81, %v2740, 0.0
    %2743 = vadd.xlane.f32.xlu0 %v2742
    %v2744 = vpop.xlane.xlu0 %2743
    %v2745 = vsel %vm81, %v2741, 0.0
    %2746 = vadd.xlane.f32.xlu0 %v2745
    %v2747 = vpop.xlane.xlu0 %2746
    %v2748 = vrcp.pop 32.0
    %v2749 = vmul.f32 %v2744, %v2748
    %v2750 = vmul.f32 %v2747, %v2748
    %v2751 = vsub.f32 %v2740, %v2749
    %v2752 = vsub.f32 %v2741, %v2750
    %v2753 = vmul.f32 %v2751, %v2751
    %v2754 = vmul.f32 %v2752, %v2752
    %v2755 = vsel %vm81, %v2753, 0.0
    %2756 = vadd.xlane.f32.xlu0 %v2755
    %v2757 = vpop.xlane.xlu0 %2756
    %v2758 = vsel %vm81, %v2754, 0.0
    %2759 = vadd.xlane.f32.xlu0 %v2758
    %v2760 = vpop.xlane.xlu0 %2759
    %v2761 = vmul.f32 %v2757, %v2748
    %v2762 = vmul.f32 %v2760, %v2748
    %v2763 = vadd.f32 %v2761, 1e-12
    %v2764 = vadd.f32 %v2762, 1e-12
    %v2765 = vrsqrt.pop %v2763
    %v2766 = vrsqrt.pop %v2764
    %v2767 = vmul.f32 %v2751, %v2765
    %v2768 = vmul.f32 %v2752, %v2766
    %v2769 = vld [vmem:[%s5] sm:$0x1]
    %v2771 = vlaneseq
    %v2772 = vshrl.u32 %v2771, 7
    %v2773 = vsub.s32 0, %v2772
    %v2774 = vrot.slane %v2769, %v2773
    %v2776 = vmul.f32 %v2767, %v2774
    %v2777 = vmul.f32 %v2768, %v2774
    %v2778 = vld [vmem:[%s6] sm:$0x1]
    %v2780 = vlaneseq
    %v2781 = vshrl.u32 %v2780, 7
    %v2782 = vsub.s32 0, %v2781
    %v2783 = vrot.slane %v2778, %v2782
    %v2785 = vadd.f32 %v2776, %v2783
    %v2786 = vadd.f32 %v2777, %v2783
    %2787 = vst.msk [vmem:[#allocation8] sm:$0xff] %vm81, %v2785
    %2788 = vst.msk [vmem:[#allocation8 + $0x8] sm:$0xff] %vm81, %v2786
    // Predicated region
    $region42: #{tpu_custom_call.1} parent=1 // pred_check
      _
    $region43: #{tpu_custom_call.1} parent=1 // pred_check_branch
      %2790 = sbr.rel (0) target = $region45
    $region44: #{tpu_custom_call.1} parent=1 // pred_region
      %s2792 = ssub.s32 256, 256
      %2793 = vsyncadd [#allocation4], %s2792
      %s2794 = sshll.u32 [#allocation8], 4
      %s2795 = int_to_ptr.vmem [resolvable:$true] %s2794
      %2800 = dma.vmem_to_hbm [thread:$0]  %s2795, 256, %s7, [#allocation4], 128, 128, 8
    $region45: #{tpu_custom_call.1} parent=1 // pred_fallthru
      _
    // Predicated region
    $region46: #{tpu_custom_call.1} parent=1 // pred_check
      _
    $region47: #{tpu_custom_call.1} parent=1 // pred_check_branch
      %2802 = sbr.rel (0) target = $region49
    $region48: #{tpu_custom_call.1} parent=1 // pred_region
      %2803 = dma.done [#allocation4], 256
    $region49: #{tpu_custom_call.1} parent=1 // pred_fallthru
      _
    %2804 = vsyncpa [#allocation3], 1
    %2805 = vsyncpa [#allocation6], 1
    %2806 = vsyncpa [#allocation4], 1

</llo_original>
